<compile_context>
chip_gen: v7x
topology: tpu7x:2x2x1
jax: 0.10.0
libtpu: 0.0.40
codegen_flags: <defaults>
</compile_context>

<pallas_src>
import math
import numpy as np
import jax
import jax.numpy as jnp
from jax.experimental import pallas as pl
from jax.experimental.pallas import tpu as pltpu


def _gaussian(window_size: int, sigma: float) -> np.ndarray:
    g = np.array(
        [math.exp(-((x - window_size // 2) ** 2) / float(2 * sigma ** 2))
         for x in range(window_size)],
        dtype=np.float64,
    )
    return (g / g.sum()).astype(np.float32)


def _banded_right_matrix(n: int, g: np.ndarray) -> np.ndarray:
    """R (n, n) such that (X @ R) == zero-padded 1-D correlation of X's rows with g."""
    ws = len(g)
    pad = ws // 2
    A = np.zeros((n, n), dtype=np.float32)
    for j in range(n):
        for d in range(ws):
            k = j + d - pad
            if 0 <= k < n:
                A[k, j] = g[d]
    return A


def ssim_pallas(img1: jax.Array, img2: jax.Array,
                window_size: int = 11, size_average: bool = True) -> jax.Array:
    """SSIM(img1, img2): Gaussian window, padding=ws//2, groups=C, mean over all."""
    assert size_average, "only size_average=True (module default) is implemented"
    # TODO(synk): size_average=False branch (per-batch mean) not implemented.
    B, C, H, W = img1.shape
    g = _gaussian(window_size, 1.5)
    n_planes = B * C

    # --- lane-packing factor Q: pack Q planes along lanes so Q*W ~ 128 ------
    if W >= 128:
        Q = 1
    else:
        divs = [d for d in range(1, n_planes + 1) if n_planes % d == 0]
        full = [d for d in divs if 128 <= d * W <= 512]
        Q = min(full) if full else max(d for d in divs if d * W <= 512)
    QW = Q * W
    num_blocks = n_planes // Q

    # Static separable-conv matrices (zero padding fused in).
    aw_np = _banded_right_matrix(W, g)                         # (W, W)  right-multiply
    awq_np = np.kron(np.eye(Q, dtype=np.float32), aw_np)       # (QW, QW) per-plane band
    ah_np = _banded_right_matrix(H, g).T                       # (H, H)  left-multiply
    awq = jnp.asarray(awq_np)
    ah = jnp.asarray(ah_np)

    # Pack: (B, C, H, W) -> (num_blocks, Q, H, W) -> (num_blocks, H, Q*W).
    # Plane q of a group occupies lanes [q*W, (q+1)*W) (layout plumbing only).
    def pack(img):
        v = img.astype(jnp.float32).reshape(num_blocks, Q, H, W)
        return v.transpose(0, 2, 1, 3).reshape(num_blocks, H, QW)

    x = pack(img1)
    y = pack(img2)

    C1 = 0.01 ** 2
    C2 = 0.03 ** 2
    total = float(B * C * H * W)

    def kernel(ah_ref, aw_ref, x_ref, y_ref, o_ref):
        def split(v):
            # f32 -> (bf16 hi, bf16 lo) with v ~= hi + lo.
            hi = v.astype(jnp.bfloat16)
            lo = (v - hi.astype(jnp.float32)).astype(jnp.bfloat16)
            return hi, lo

        ah_hi, ah_lo = split(ah_ref[...])          # (H, H)
        aw_hi, aw_lo = split(aw_ref[...])          # (QW, QW)
        xp = x_ref[0]                              # (H, QW)
        yp = y_ref[0]

        def mm3(a_hi, a_lo, b_hi, b_lo):
            # ~f32-accurate matmul as 3 single-pass bf16 MXU matmuls
            # (== Precision.HIGH; half the MXU cost of HIGHEST).
            return (jnp.dot(a_hi, b_hi, preferred_element_type=jnp.float32)
                    + jnp.dot(a_hi, b_lo, preferred_element_type=jnp.float32)
                    + jnp.dot(a_lo, b_hi, preferred_element_type=jnp.float32))

        def gconv(v):
            # Separable padded Gaussian conv: (v @ AwQ) then (Ah @ .), on the MXU.
            v_hi, v_lo = split(v)
            t = mm3(v_hi, v_lo, aw_hi, aw_lo)          # W pass (per-plane band)
            t_hi, t_lo = split(t)
            return mm3(ah_hi, ah_lo, t_hi, t_lo)       # H pass

        mu1 = gconv(xp)
        mu2 = gconv(yp)
        mu1_sq = mu1 * mu1
        mu2_sq = mu2 * mu2
        mu1_mu2 = mu1 * mu2
        # Fold sigmas into numerator/denominator as they are produced to keep
        # the peak live set small (larger blocks fit the same VMEM budget).
        sigma12 = gconv(xp * yp) - mu1_mu2
        num = (2.0 * mu1_mu2 + C1) * (2.0 * sigma12 + C2)
        sigma_sum = (gconv(xp * xp) - mu1_sq) + (gconv(yp * yp) - mu2_sq)
        den = (mu1_sq + mu2_sq + C1) * (sigma_sum + C2)
        ssim_map = num / den

        # Lane-dense partial sum for this block (reduce only over sublanes).
        o_ref[...] = jnp.sum(ssim_map, axis=0, keepdims=True).reshape(1, 1, QW)

    # Rough per-step working-set estimate (bytes); only raise the scoped VMEM
    # limit when actually needed (generation-friendly: never exceeds 64 MiB).
    est = 4 * (4 * H * QW               # x, y double-buffered
               + 14 * H * QW            # in-kernel f32/bf16 temporaries (upper bound)
               + 2 * (H * H + QW * QW)  # Ah, AwQ (default double-buffered, tiny)
               + 2 * QW)                # partial-sum output
    cp_kwargs = dict(dimension_semantics=("parallel",))
    if est > (24 << 20):
        cp_kwargs["vmem_limit_bytes"] = int(min(2 * est, 64 << 20))

    img_spec = pl.BlockSpec((1, H, QW), lambda i: (i, 0, 0))
    partials = pl.pallas_call(
        kernel,
        out_shape=jax.ShapeDtypeStruct((num_blocks, 1, QW), jnp.float32),
        grid_spec=pltpu.PrefetchScalarGridSpec(
            num_scalar_prefetch=0,
            grid=(num_blocks,),
            in_specs=[pl.BlockSpec((H, H), lambda i: (0, 0)),     # Ah
                      pl.BlockSpec((QW, QW), lambda i: (0, 0)),   # AwQ
                      img_spec, img_spec],
            out_specs=pl.BlockSpec((1, 1, QW), lambda i: (i, 0, 0)),
        ),
        compiler_params=pltpu.CompilerParams(**cp_kwargs),
    )(ah, awq, x, y)
    # TODO(synk): for W,H >= ~256, band-tile the matmuls (or use pltpu.roll
    # shift-FMAs) to skip the all-zero bands, and add a row-strip grid dim
    # with a (window_size-1)-row halo for planes whose working set exceeds
    # v7x's 64 MiB VMEM.
    return jnp.sum(partials) / total


def ssim_reference(img1: jax.Array, img2: jax.Array, window_size: int = 11) -> jax.Array:
    """Pure-JAX reference mirroring the PyTorch _ssim (depthwise conv via lax)."""
    B, C, H, W = img1.shape
    pad = window_size // 2
    g = _gaussian(window_size, 1.5)
    w2d = jnp.asarray(np.outer(g, g).astype(np.float32))
    kern = jnp.broadcast_to(w2d, (C, 1, window_size, window_size))

    def conv(a):
        return jax.lax.conv_general_dilated(
            a.astype(jnp.float32), kern, window_strides=(1, 1),
            padding=[(pad, pad), (pad, pad)],
            dimension_numbers=("NCHW", "OIHW", "NCHW"),
            feature_group_count=C,
            precision=jax.lax.Precision.HIGHEST)

    mu1 = conv(img1)
    mu2 = conv(img2)
    mu1_sq = mu1 ** 2
    mu2_sq = mu2 ** 2
    mu1_mu2 = mu1 * mu2
    sigma1_sq = conv(img1 * img1) - mu1_sq
    sigma2_sq = conv(img2 * img2) - mu2_sq
    sigma12 = conv(img1 * img2) - mu1_mu2
    C1 = 0.01 ** 2
    C2 = 0.03 ** 2
    ssim_map = ((2 * mu1_mu2 + C1) * (2 * sigma12 + C2)) / (
        (mu1_sq + mu2_sq + C1) * (sigma1_sq + sigma2_sq + C2))
    return jnp.mean(ssim_map)


if __name__ == "__main__":
    key = jax.random.PRNGKey(0)
    k1, k2 = jax.random.split(key)
    B, C, H, W = 2, 4, 16, 16
    img1 = jax.random.uniform(k1, (B, C, H, W), dtype=jnp.float32)
    img2 = jax.random.uniform(k2, (B, C, H, W), dtype=jnp.float32)

    out = ssim_pallas(img1, img2, window_size=11, size_average=True)
    out = jax.block_until_ready(out)

    ref = jax.block_until_ready(ssim_reference(img1, img2, window_size=11))
    # Tolerance sized for bf16x3 (Precision.HIGH-equivalent) conv accuracy.
    np.testing.assert_allclose(np.asarray(out), np.asarray(ref), rtol=2e-4, atol=2e-5)

    print("KERNEL_OK")
</pallas_src>

<mosaic_0001>
module attributes {stable_mosaic.version = 11 : i64} {
  func.func @kernel(%arg0: i32, %arg1: memref<16x16xf32, #tpu.memory_space<vmem>>, %arg2: memref<128x128xf32, #tpu.memory_space<vmem>>, %arg3: memref<1x16x128xf32, #tpu.memory_space<vmem>>, %arg4: memref<1x16x128xf32, #tpu.memory_space<vmem>>, %arg5: memref<1x1x128xf32, #tpu.memory_space<vmem>>) attributes {dimension_semantics = [#tpu.dimension_semantics<parallel>], iteration_bounds = array<i64: 1>, scalar_prefetch = 0 : i64, scratch_operands = 0 : i64, tpu.core_type = #tpu.core_type<tc>, window_params = [{pipeline_mode = #tpu.pipeline_mode<synchronous>, transform_indices = @transform_0, window_bounds = array<i64: 16, 16>}, {pipeline_mode = #tpu.pipeline_mode<synchronous>, transform_indices = @transform_1, window_bounds = array<i64: 128, 128>}, {transform_indices = @transform_2, window_bounds = array<i64: 1, 16, 128>}, {transform_indices = @transform_3, window_bounds = array<i64: 1, 16, 128>}, {transform_indices = @transform_4, window_bounds = array<i64: 1, 1, 128>}]} {
    %c0 = arith.constant 0 : index
    %c0_0 = arith.constant 0 : index
    %0 = vector.load %arg1[%c0, %c0_0] : memref<16x16xf32, #tpu.memory_space<vmem>>, vector<16x16xf32>
    %1 = arith.truncf %0 : vector<16x16xf32> to vector<16x16xbf16>
    %2 = arith.extf %1 : vector<16x16xbf16> to vector<16x16xf32>
    %3 = arith.subf %0, %2 : vector<16x16xf32>
    %4 = arith.truncf %3 : vector<16x16xf32> to vector<16x16xbf16>
    %c0_1 = arith.constant 0 : index
    %c0_2 = arith.constant 0 : index
    %5 = vector.load %arg2[%c0_1, %c0_2] : memref<128x128xf32, #tpu.memory_space<vmem>>, vector<128x128xf32>
    %6 = arith.truncf %5 : vector<128x128xf32> to vector<128x128xbf16>
    %7 = arith.extf %6 : vector<128x128xbf16> to vector<128x128xf32>
    %8 = arith.subf %5, %7 : vector<128x128xf32>
    %9 = arith.truncf %8 : vector<128x128xf32> to vector<128x128xbf16>
    %c0_3 = arith.constant 0 : index
    %c0_4 = arith.constant 0 : index
    %c0_5 = arith.constant 0 : index
    %10 = vector.load %arg3[%c0_3, %c0_4, %c0_5] : memref<1x16x128xf32, #tpu.memory_space<vmem>>, vector<1x16x128xf32>
    %11 = vector.shape_cast %10 : vector<1x16x128xf32> to vector<16x128xf32>
    %c0_6 = arith.constant 0 : index
    %c0_7 = arith.constant 0 : index
    %c0_8 = arith.constant 0 : index
    %12 = vector.load %arg4[%c0_6, %c0_7, %c0_8] : memref<1x16x128xf32, #tpu.memory_space<vmem>>, vector<1x16x128xf32>
    %13 = vector.shape_cast %12 : vector<1x16x128xf32> to vector<16x128xf32>
    %14 = arith.truncf %11 : vector<16x128xf32> to vector<16x128xbf16>
    %15 = arith.extf %14 : vector<16x128xbf16> to vector<16x128xf32>
    %16 = arith.subf %11, %15 : vector<16x128xf32>
    %17 = arith.truncf %16 : vector<16x128xf32> to vector<16x128xbf16>
    %cst = arith.constant dense<0.000000e+00> : vector<16x128xf32>
    %18 = tpu.matmul %14, %6, %cst {dimension_numbers = #tpu.dot_dimension_numbers<[1], [0], [0], [1], [0, 0, 1, 1], [], []>} : vector<16x128xbf16>, vector<128x128xbf16>, vector<16x128xf32> -> vector<16x128xf32>
    %cst_9 = arith.constant dense<0.000000e+00> : vector<16x128xf32>
    %19 = tpu.matmul %14, %9, %cst_9 {dimension_numbers = #tpu.dot_dimension_numbers<[1], [0], [0], [1], [0, 0, 1, 1], [], []>} : vector<16x128xbf16>, vector<128x128xbf16>, vector<16x128xf32> -> vector<16x128xf32>
    %20 = arith.addf %18, %19 : vector<16x128xf32>
    %cst_10 = arith.constant dense<0.000000e+00> : vector<16x128xf32>
    %21 = tpu.matmul %17, %6, %cst_10 {dimension_numbers = #tpu.dot_dimension_numbers<[1], [0], [0], [1], [0, 0, 1, 1], [], []>} : vector<16x128xbf16>, vector<128x128xbf16>, vector<16x128xf32> -> vector<16x128xf32>
    %22 = arith.addf %20, %21 : vector<16x128xf32>
    %23 = arith.truncf %22 : vector<16x128xf32> to vector<16x128xbf16>
    %24 = arith.extf %23 : vector<16x128xbf16> to vector<16x128xf32>
    %25 = arith.subf %22, %24 : vector<16x128xf32>
    %26 = arith.truncf %25 : vector<16x128xf32> to vector<16x128xbf16>
    %cst_11 = arith.constant dense<0.000000e+00> : vector<16x128xf32>
    %27 = tpu.matmul %1, %23, %cst_11 {dimension_numbers = #tpu.dot_dimension_numbers<[1], [0], [0], [1], [0, 0, 1, 1], [], []>} : vector<16x16xbf16>, vector<16x128xbf16>, vector<16x128xf32> -> vector<16x128xf32>
    %cst_12 = arith.constant dense<0.000000e+00> : vector<16x128xf32>
    %28 = tpu.matmul %1, %26, %cst_12 {dimension_numbers = #tpu.dot_dimension_numbers<[1], [0], [0], [1], [0, 0, 1, 1], [], []>} : vector<16x16xbf16>, vector<16x128xbf16>, vector<16x128xf32> -> vector<16x128xf32>
    %29 = arith.addf %27, %28 : vector<16x128xf32>
    %cst_13 = arith.constant dense<0.000000e+00> : vector<16x128xf32>
    %30 = tpu.matmul %4, %23, %cst_13 {dimension_numbers = #tpu.dot_dimension_numbers<[1], [0], [0], [1], [0, 0, 1, 1], [], []>} : vector<16x16xbf16>, vector<16x128xbf16>, vector<16x128xf32> -> vector<16x128xf32>
    %31 = arith.addf %29, %30 : vector<16x128xf32>
    %32 = arith.truncf %13 : vector<16x128xf32> to vector<16x128xbf16>
    %33 = arith.extf %32 : vector<16x128xbf16> to vector<16x128xf32>
    %34 = arith.subf %13, %33 : vector<16x128xf32>
    %35 = arith.truncf %34 : vector<16x128xf32> to vector<16x128xbf16>
    %cst_14 = arith.constant dense<0.000000e+00> : vector<16x128xf32>
    %36 = tpu.matmul %32, %6, %cst_14 {dimension_numbers = #tpu.dot_dimension_numbers<[1], [0], [0], [1], [0, 0, 1, 1], [], []>} : vector<16x128xbf16>, vector<128x128xbf16>, vector<16x128xf32> -> vector<16x128xf32>
    %cst_15 = arith.constant dense<0.000000e+00> : vector<16x128xf32>
    %37 = tpu.matmul %32, %9, %cst_15 {dimension_numbers = #tpu.dot_dimension_numbers<[1], [0], [0], [1], [0, 0, 1, 1], [], []>} : vector<16x128xbf16>, vector<128x128xbf16>, vector<16x128xf32> -> vector<16x128xf32>
    %38 = arith.addf %36, %37 : vector<16x128xf32>
    %cst_16 = arith.constant dense<0.000000e+00> : vector<16x128xf32>
    %39 = tpu.matmul %35, %6, %cst_16 {dimension_numbers = #tpu.dot_dimension_numbers<[1], [0], [0], [1], [0, 0, 1, 1], [], []>} : vector<16x128xbf16>, vector<128x128xbf16>, vector<16x128xf32> -> vector<16x128xf32>
    %40 = arith.addf %38, %39 : vector<16x128xf32>
    %41 = arith.truncf %40 : vector<16x128xf32> to vector<16x128xbf16>
    %42 = arith.extf %41 : vector<16x128xbf16> to vector<16x128xf32>
    %43 = arith.subf %40, %42 : vector<16x128xf32>
    %44 = arith.truncf %43 : vector<16x128xf32> to vector<16x128xbf16>
    %cst_17 = arith.constant dense<0.000000e+00> : vector<16x128xf32>
    %45 = tpu.matmul %1, %41, %cst_17 {dimension_numbers = #tpu.dot_dimension_numbers<[1], [0], [0], [1], [0, 0, 1, 1], [], []>} : vector<16x16xbf16>, vector<16x128xbf16>, vector<16x128xf32> -> vector<16x128xf32>
    %cst_18 = arith.constant dense<0.000000e+00> : vector<16x128xf32>
    %46 = tpu.matmul %1, %44, %cst_18 {dimension_numbers = #tpu.dot_dimension_numbers<[1], [0], [0], [1], [0, 0, 1, 1], [], []>} : vector<16x16xbf16>, vector<16x128xbf16>, vector<16x128xf32> -> vector<16x128xf32>
    %47 = arith.addf %45, %46 : vector<16x128xf32>
    %cst_19 = arith.constant dense<0.000000e+00> : vector<16x128xf32>
    %48 = tpu.matmul %4, %41, %cst_19 {dimension_numbers = #tpu.dot_dimension_numbers<[1], [0], [0], [1], [0, 0, 1, 1], [], []>} : vector<16x16xbf16>, vector<16x128xbf16>, vector<16x128xf32> -> vector<16x128xf32>
    %49 = arith.addf %47, %48 : vector<16x128xf32>
    %50 = arith.mulf %31, %31 : vector<16x128xf32>
    %51 = arith.mulf %49, %49 : vector<16x128xf32>
    %52 = arith.mulf %31, %49 : vector<16x128xf32>
    %53 = arith.mulf %11, %13 : vector<16x128xf32>
    %54 = arith.truncf %53 : vector<16x128xf32> to vector<16x128xbf16>
    %55 = arith.extf %54 : vector<16x128xbf16> to vector<16x128xf32>
    %56 = arith.subf %53, %55 : vector<16x128xf32>
    %57 = arith.truncf %56 : vector<16x128xf32> to vector<16x128xbf16>
    %cst_20 = arith.constant dense<0.000000e+00> : vector<16x128xf32>
    %58 = tpu.matmul %54, %6, %cst_20 {dimension_numbers = #tpu.dot_dimension_numbers<[1], [0], [0], [1], [0, 0, 1, 1], [], []>} : vector<16x128xbf16>, vector<128x128xbf16>, vector<16x128xf32> -> vector<16x128xf32>
    %cst_21 = arith.constant dense<0.000000e+00> : vector<16x128xf32>
    %59 = tpu.matmul %54, %9, %cst_21 {dimension_numbers = #tpu.dot_dimension_numbers<[1], [0], [0], [1], [0, 0, 1, 1], [], []>} : vector<16x128xbf16>, vector<128x128xbf16>, vector<16x128xf32> -> vector<16x128xf32>
    %60 = arith.addf %58, %59 : vector<16x128xf32>
    %cst_22 = arith.constant dense<0.000000e+00> : vector<16x128xf32>
    %61 = tpu.matmul %57, %6, %cst_22 {dimension_numbers = #tpu.dot_dimension_numbers<[1], [0], [0], [1], [0, 0, 1, 1], [], []>} : vector<16x128xbf16>, vector<128x128xbf16>, vector<16x128xf32> -> vector<16x128xf32>
    %62 = arith.addf %60, %61 : vector<16x128xf32>
    %63 = arith.truncf %62 : vector<16x128xf32> to vector<16x128xbf16>
    %64 = arith.extf %63 : vector<16x128xbf16> to vector<16x128xf32>
    %65 = arith.subf %62, %64 : vector<16x128xf32>
    %66 = arith.truncf %65 : vector<16x128xf32> to vector<16x128xbf16>
    %cst_23 = arith.constant dense<0.000000e+00> : vector<16x128xf32>
    %67 = tpu.matmul %1, %63, %cst_23 {dimension_numbers = #tpu.dot_dimension_numbers<[1], [0], [0], [1], [0, 0, 1, 1], [], []>} : vector<16x16xbf16>, vector<16x128xbf16>, vector<16x128xf32> -> vector<16x128xf32>
    %cst_24 = arith.constant dense<0.000000e+00> : vector<16x128xf32>
    %68 = tpu.matmul %1, %66, %cst_24 {dimension_numbers = #tpu.dot_dimension_numbers<[1], [0], [0], [1], [0, 0, 1, 1], [], []>} : vector<16x16xbf16>, vector<16x128xbf16>, vector<16x128xf32> -> vector<16x128xf32>
    %69 = arith.addf %67, %68 : vector<16x128xf32>
    %cst_25 = arith.constant dense<0.000000e+00> : vector<16x128xf32>
    %70 = tpu.matmul %4, %63, %cst_25 {dimension_numbers = #tpu.dot_dimension_numbers<[1], [0], [0], [1], [0, 0, 1, 1], [], []>} : vector<16x16xbf16>, vector<16x128xbf16>, vector<16x128xf32> -> vector<16x128xf32>
    %71 = arith.addf %69, %70 : vector<16x128xf32>
    %72 = arith.subf %71, %52 : vector<16x128xf32>
    %cst_26 = arith.constant 2.000000e+00 : f32
    %73 = vector.broadcast %cst_26 : f32 to vector<16x128xf32>
    %74 = arith.mulf %73, %52 : vector<16x128xf32>
    %cst_27 = arith.constant 9.99999974E-5 : f32
    %75 = vector.broadcast %cst_27 : f32 to vector<16x128xf32>
    %76 = arith.addf %74, %75 : vector<16x128xf32>
    %cst_28 = arith.constant 2.000000e+00 : f32
    %77 = vector.broadcast %cst_28 : f32 to vector<16x128xf32>
    %78 = arith.mulf %77, %72 : vector<16x128xf32>
    %cst_29 = arith.constant 8.99999984E-4 : f32
    %79 = vector.broadcast %cst_29 : f32 to vector<16x128xf32>
    %80 = arith.addf %78, %79 : vector<16x128xf32>
    %81 = arith.mulf %76, %80 : vector<16x128xf32>
    %82 = arith.mulf %11, %11 : vector<16x128xf32>
    %83 = arith.truncf %82 : vector<16x128xf32> to vector<16x128xbf16>
    %84 = arith.extf %83 : vector<16x128xbf16> to vector<16x128xf32>
    %85 = arith.subf %82, %84 : vector<16x128xf32>
    %86 = arith.truncf %85 : vector<16x128xf32> to vector<16x128xbf16>
    %cst_30 = arith.constant dense<0.000000e+00> : vector<16x128xf32>
    %87 = tpu.matmul %83, %6, %cst_30 {dimension_numbers = #tpu.dot_dimension_numbers<[1], [0], [0], [1], [0, 0, 1, 1], [], []>} : vector<16x128xbf16>, vector<128x128xbf16>, vector<16x128xf32> -> vector<16x128xf32>
    %cst_31 = arith.constant dense<0.000000e+00> : vector<16x128xf32>
    %88 = tpu.matmul %83, %9, %cst_31 {dimension_numbers = #tpu.dot_dimension_numbers<[1], [0], [0], [1], [0, 0, 1, 1], [], []>} : vector<16x128xbf16>, vector<128x128xbf16>, vector<16x128xf32> -> vector<16x128xf32>
    %89 = arith.addf %87, %88 : vector<16x128xf32>
    %cst_32 = arith.constant dense<0.000000e+00> : vector<16x128xf32>
    %90 = tpu.matmul %86, %6, %cst_32 {dimension_numbers = #tpu.dot_dimension_numbers<[1], [0], [0], [1], [0, 0, 1, 1], [], []>} : vector<16x128xbf16>, vector<128x128xbf16>, vector<16x128xf32> -> vector<16x128xf32>
    %91 = arith.addf %89, %90 : vector<16x128xf32>
    %92 = arith.truncf %91 : vector<16x128xf32> to vector<16x128xbf16>
    %93 = arith.extf %92 : vector<16x128xbf16> to vector<16x128xf32>
    %94 = arith.subf %91, %93 : vector<16x128xf32>
    %95 = arith.truncf %94 : vector<16x128xf32> to vector<16x128xbf16>
    %cst_33 = arith.constant dense<0.000000e+00> : vector<16x128xf32>
    %96 = tpu.matmul %1, %92, %cst_33 {dimension_numbers = #tpu.dot_dimension_numbers<[1], [0], [0], [1], [0, 0, 1, 1], [], []>} : vector<16x16xbf16>, vector<16x128xbf16>, vector<16x128xf32> -> vector<16x128xf32>
    %cst_34 = arith.constant dense<0.000000e+00> : vector<16x128xf32>
    %97 = tpu.matmul %1, %95, %cst_34 {dimension_numbers = #tpu.dot_dimension_numbers<[1], [0], [0], [1], [0, 0, 1, 1], [], []>} : vector<16x16xbf16>, vector<16x128xbf16>, vector<16x128xf32> -> vector<16x128xf32>
    %98 = arith.addf %96, %97 : vector<16x128xf32>
    %cst_35 = arith.constant dense<0.000000e+00> : vector<16x128xf32>
    %99 = tpu.matmul %4, %92, %cst_35 {dimension_numbers = #tpu.dot_dimension_numbers<[1], [0], [0], [1], [0, 0, 1, 1], [], []>} : vector<16x16xbf16>, vector<16x128xbf16>, vector<16x128xf32> -> vector<16x128xf32>
    %100 = arith.addf %98, %99 : vector<16x128xf32>
    %101 = arith.subf %100, %50 : vector<16x128xf32>
    %102 = arith.mulf %13, %13 : vector<16x128xf32>
    %103 = arith.truncf %102 : vector<16x128xf32> to vector<16x128xbf16>
    %104 = arith.extf %103 : vector<16x128xbf16> to vector<16x128xf32>
    %105 = arith.subf %102, %104 : vector<16x128xf32>
    %106 = arith.truncf %105 : vector<16x128xf32> to vector<16x128xbf16>
    %cst_36 = arith.constant dense<0.000000e+00> : vector<16x128xf32>
    %107 = tpu.matmul %103, %6, %cst_36 {dimension_numbers = #tpu.dot_dimension_numbers<[1], [0], [0], [1], [0, 0, 1, 1], [], []>} : vector<16x128xbf16>, vector<128x128xbf16>, vector<16x128xf32> -> vector<16x128xf32>
    %cst_37 = arith.constant dense<0.000000e+00> : vector<16x128xf32>
    %108 = tpu.matmul %103, %9, %cst_37 {dimension_numbers = #tpu.dot_dimension_numbers<[1], [0], [0], [1], [0, 0, 1, 1], [], []>} : vector<16x128xbf16>, vector<128x128xbf16>, vector<16x128xf32> -> vector<16x128xf32>
    %109 = arith.addf %107, %108 : vector<16x128xf32>
    %cst_38 = arith.constant dense<0.000000e+00> : vector<16x128xf32>
    %110 = tpu.matmul %106, %6, %cst_38 {dimension_numbers = #tpu.dot_dimension_numbers<[1], [0], [0], [1], [0, 0, 1, 1], [], []>} : vector<16x128xbf16>, vector<128x128xbf16>, vector<16x128xf32> -> vector<16x128xf32>
    %111 = arith.addf %109, %110 : vector<16x128xf32>
    %112 = arith.truncf %111 : vector<16x128xf32> to vector<16x128xbf16>
    %113 = arith.extf %112 : vector<16x128xbf16> to vector<16x128xf32>
    %114 = arith.subf %111, %113 : vector<16x128xf32>
    %115 = arith.truncf %114 : vector<16x128xf32> to vector<16x128xbf16>
    %cst_39 = arith.constant dense<0.000000e+00> : vector<16x128xf32>
    %116 = tpu.matmul %1, %112, %cst_39 {dimension_numbers = #tpu.dot_dimension_numbers<[1], [0], [0], [1], [0, 0, 1, 1], [], []>} : vector<16x16xbf16>, vector<16x128xbf16>, vector<16x128xf32> -> vector<16x128xf32>
    %cst_40 = arith.constant dense<0.000000e+00> : vector<16x128xf32>
    %117 = tpu.matmul %1, %115, %cst_40 {dimension_numbers = #tpu.dot_dimension_numbers<[1], [0], [0], [1], [0, 0, 1, 1], [], []>} : vector<16x16xbf16>, vector<16x128xbf16>, vector<16x128xf32> -> vector<16x128xf32>
    %118 = arith.addf %116, %117 : vector<16x128xf32>
    %cst_41 = arith.constant dense<0.000000e+00> : vector<16x128xf32>
    %119 = tpu.matmul %4, %112, %cst_41 {dimension_numbers = #tpu.dot_dimension_numbers<[1], [0], [0], [1], [0, 0, 1, 1], [], []>} : vector<16x16xbf16>, vector<16x128xbf16>, vector<16x128xf32> -> vector<16x128xf32>
    %120 = arith.addf %118, %119 : vector<16x128xf32>
    %121 = arith.subf %120, %51 : vector<16x128xf32>
    %122 = arith.addf %101, %121 : vector<16x128xf32>
    %123 = arith.addf %50, %51 : vector<16x128xf32>
    %cst_42 = arith.constant 9.99999974E-5 : f32
    %124 = vector.broadcast %cst_42 : f32 to vector<16x128xf32>
    %125 = arith.addf %123, %124 : vector<16x128xf32>
    %cst_43 = arith.constant 8.99999984E-4 : f32
    %126 = vector.broadcast %cst_43 : f32 to vector<16x128xf32>
    %127 = arith.addf %122, %126 : vector<16x128xf32>
    %128 = arith.mulf %125, %127 : vector<16x128xf32>
    %129 = arith.divf %81, %128 : vector<16x128xf32>
    %cst_44 = arith.constant dense<0.000000e+00> : vector<128xf32>
    %130 = vector.multi_reduction <add>, %129, %cst_44 [0] : vector<16x128xf32> to vector<128xf32>
    %131 = vector.shape_cast %130 : vector<128xf32> to vector<1x128xf32>
    %132 = vector.shape_cast %131 : vector<1x128xf32> to vector<1x1x128xf32>
    %c0_45 = arith.constant 0 : index
    %c0_46 = arith.constant 0 : index
    %c0_47 = arith.constant 0 : index
    %133 = vector.load %arg5[%c0_45, %c0_46, %c0_47] : memref<1x1x128xf32, #tpu.memory_space<vmem>>, vector<1x1x128xf32>
    tpu.vector_store %arg5[%c0_45, %c0_46, %c0_47], %132 {strides = array<i32>} : memref<1x1x128xf32, #tpu.memory_space<vmem>>, vector<1x1x128xf32>,
    return
  }
  func.func @transform_0(%arg0: i32) -> (i32, i32) {
    %c0_i32 = arith.constant 0 : i32
    %c0_i32_0 = arith.constant 0 : i32
    %c0_i32_1 = arith.constant 0 : i32
    return %c0_i32, %c0_i32_0 : i32, i32
  }
  func.func @transform_1(%arg0: i32) -> (i32, i32) {
    %c0_i32 = arith.constant 0 : i32
    %c0_i32_0 = arith.constant 0 : i32
    %c0_i32_1 = arith.constant 0 : i32
    return %c0_i32, %c0_i32_0 : i32, i32
  }
  func.func @transform_2(%arg0: i32) -> (i32, i32, i32) {
    %c0_i32 = arith.constant 0 : i32
    %c0_i32_0 = arith.constant 0 : i32
    %c0_i32_1 = arith.constant 0 : i32
    return %arg0, %c0_i32, %c0_i32_0 : i32, i32, i32
  }
  func.func @transform_3(%arg0: i32) -> (i32, i32, i32) {
    %c0_i32 = arith.constant 0 : i32
    %c0_i32_0 = arith.constant 0 : i32
    %c0_i32_1 = arith.constant 0 : i32
    return %arg0, %c0_i32, %c0_i32_0 : i32, i32, i32
  }
  func.func @transform_4(%arg0: i32) -> (i32, i32, i32) {
    %c0_i32 = arith.constant 0 : i32
    %c0_i32_0 = arith.constant 0 : i32
    %c0_i32_1 = arith.constant 0 : i32
    return %arg0, %c0_i32, %c0_i32_0 : i32, i32, i32
  }
}

</mosaic_0001>

<llo_original>
// kernel: tpu_custom_call.1
$region0: #{tpu_custom_call.1}
  #allocation0 [shape = 'u32[]', space=smem, size = 0x4, offset = 0x4, fixed_abs, tag = 'smem constant byte address 0x4 - core index']
  #allocation1 [shape = 'u32[144,128]{1,0:T(1,128)}', space=vmem, size = 0x12000, scoped, tag = 'internal scratch']
  %s0 = inlined_call_operand.hbm [shape: f32[16,16], index: 0, kind: input, shape index: {}]
  %s1 = inlined_call_operand.hbm [shape: f32[128,128], index: 1, kind: input, shape index: {}]
  %s2 = inlined_call_operand.hbm [shape: f32[1,16,128], index: 2, kind: input, shape index: {}]
  %s3 = inlined_call_operand.hbm [shape: f32[1,16,128], index: 3, kind: input, shape index: {}]
  %s4 = inlined_call_operand.hbm [shape: f32[1,1,128], index: 4, kind: output, shape index: {}]
  %s5 = sld [smem:[#allocation0]]
  $region42: #{tpu_custom_call.1} parent=0
    _
  %s7 = ssub.s32 1, %s5
  %s8 = scalar_select 0, %s7, %s5
  $region1: #{tpu_custom_call.1} parent=0
    #allocation2 [shape = 'u8[8192]{0}', space=vmem, size = 0x2000, scoped, tag = 'input window, operand 0, single buffered']
    #allocation3 [shape = 's32[1]{0}', space=sflag, size = 0x4, scoped, tag = 'scoped memory for tpu_custom_call.1']
    #allocation4 [shape = 's32[1]{0}', space=sflag, size = 0x4, scoped, tag = 'scoped memory for tpu_custom_call.1']
    #allocation5 [shape = 'u8[65536]{0}', space=vmem, size = 0x10000, scoped, tag = 'input window, operand 1, single buffered']
    #allocation6 [shape = 's32[1]{0}', space=sflag, size = 0x4, scoped, tag = 'scoped memory for tpu_custom_call.1']
    #allocation7 [shape = 'u8[8192]{0}', space=vmem, size = 0x2000, scoped, tag = 'input window, operand 2, single buffered']
    #allocation8 [shape = 'u8[8192]{0}', space=vmem, size = 0x2000, scoped, tag = 'input window, operand 3, single buffered']
    #allocation9 [shape = 's32[1]{0}', space=sflag, size = 0x4, scoped, tag = 'scoped memory for tpu_custom_call.1']
    #allocation10 [shape = 'u8[512]{0}', space=vmem, size = 0x400, scoped, tag = 'output window, operand 0, single buffered']
    %9 = vsyncpa [#allocation3], 0
    %10 = vsyncpa [#allocation6], 0
    %11 = vsyncpa [#allocation9], 0
    %12 = vsyncpa [#allocation4], 0
    // Predicated region
    $region2: #{tpu_custom_call.1} parent=1 // pred_check
      _
    $region3: #{tpu_custom_call.1} parent=1 // pred_check_branch
      %14 = sbr.rel (0) target = $region5
    $region4: #{tpu_custom_call.1} parent=1 // pred_region
      %s16 = ssub.s32 256, 256
      %17 = vsyncadd [#allocation3], %s16
      %s18 = sshll.u32 [#allocation2], 4
      %s19 = int_to_ptr.vmem [resolvable:$true] %s18
      %24 = dma.hbm_to_vmem [thread:$0]  %s0, 256, %s19, [#allocation3], 128, 128, 8
    $region5: #{tpu_custom_call.1} parent=1 // pred_fallthru
      _
    // Predicated region
    $region6: #{tpu_custom_call.1} parent=1 // pred_check
      _
    $region7: #{tpu_custom_call.1} parent=1 // pred_check_branch
      %26 = sbr.rel (0) target = $region9
    $region8: #{tpu_custom_call.1} parent=1 // pred_region
      %s28 = ssub.s32 2048, 2048
      %29 = vsyncadd [#allocation6], %s28
      %s30 = sshll.u32 [#allocation5], 4
      %s31 = int_to_ptr.vmem [resolvable:$true] %s30
      %36 = dma.hbm_to_vmem [thread:$0]  %s1, 2048, %s31, [#allocation6], 128, 128, 8
    $region9: #{tpu_custom_call.1} parent=1 // pred_fallthru
      _
    // Predicated region
    $region10: #{tpu_custom_call.1} parent=1 // pred_check
      _
    $region11: #{tpu_custom_call.1} parent=1 // pred_check_branch
      %38 = sbr.rel (0) target = $region13
    $region12: #{tpu_custom_call.1} parent=1 // pred_region
      %s40 = ssub.s32 256, 256
      %41 = vsyncadd [#allocation6], %s40
      %s42 = sshll.u32 [#allocation7], 4
      %s43 = int_to_ptr.vmem [resolvable:$true] %s42
      %48 = dma.hbm_to_vmem [thread:$0]  %s2, 256, %s43, [#allocation6], 128, 128, 8
    $region13: #{tpu_custom_call.1} parent=1 // pred_fallthru
      _
    // Predicated region
    $region14: #{tpu_custom_call.1} parent=1 // pred_check
      _
    $region15: #{tpu_custom_call.1} parent=1 // pred_check_branch
      %50 = sbr.rel (0) target = $region17
    $region16: #{tpu_custom_call.1} parent=1 // pred_region
      %s52 = ssub.s32 256, 256
      %53 = vsyncadd [#allocation9], %s52
      %s54 = sshll.u32 [#allocation8], 4
      %s55 = int_to_ptr.vmem [resolvable:$true] %s54
      %60 = dma.hbm_to_vmem [thread:$0]  %s3, 256, %s55, [#allocation9], 128, 128, 8
    $region17: #{tpu_custom_call.1} parent=1 // pred_fallthru
      _
    // Predicated region
    $region18: #{tpu_custom_call.1} parent=1 // pred_check
      _
    $region19: #{tpu_custom_call.1} parent=1 // pred_check_branch
      %62 = sbr.rel (0) target = $region21
    $region20: #{tpu_custom_call.1} parent=1 // pred_region
      %63 = dma.done [#allocation3], 256
    $region21: #{tpu_custom_call.1} parent=1 // pred_fallthru
      _
    // Predicated region
    $region22: #{tpu_custom_call.1} parent=1 // pred_check
      _
    $region23: #{tpu_custom_call.1} parent=1 // pred_check_branch
      %65 = sbr.rel (0) target = $region25
    $region24: #{tpu_custom_call.1} parent=1 // pred_region
      %66 = dma.done [#allocation6], 2048
    $region25: #{tpu_custom_call.1} parent=1 // pred_fallthru
      _
    // Predicated region
    $region26: #{tpu_custom_call.1} parent=1 // pred_check
      _
    $region27: #{tpu_custom_call.1} parent=1 // pred_check_branch
      %68 = sbr.rel (0) target = $region29
    $region28: #{tpu_custom_call.1} parent=1 // pred_region
      %69 = dma.done [#allocation6], 256
    $region29: #{tpu_custom_call.1} parent=1 // pred_fallthru
      _
    // Predicated region
    $region30: #{tpu_custom_call.1} parent=1 // pred_check
      _
    $region31: #{tpu_custom_call.1} parent=1 // pred_check_branch
      %71 = sbr.rel (0) target = $region33
    $region32: #{tpu_custom_call.1} parent=1 // pred_region
      %72 = dma.done [#allocation9], 256
    $region33: #{tpu_custom_call.1} parent=1 // pred_fallthru
      _
    %v74 = vld [vmem:[#allocation2] sm:$0xff]
    %v75 = vld [vmem:[#allocation2 + $0x8] sm:$0xff]
    %v76 = vpack.c.bf16 %v75, %v74
    %v77 = vunpack.c.l.bf16 %v76
    %v78 = vunpack.c.h.bf16 %v76
    %v79 = vsub.f32 %v74, %v77
    %v80 = vsub.f32 %v75, %v78
    %v81 = vpack.c.bf16 %v80, %v79
    %v82 = vld [vmem:[#allocation5] sm:$0xff]
    %v83 = vld [vmem:[#allocation5 + $0x8] sm:$0xff]
    %v84 = vld [vmem:[#allocation5 + $0x10] sm:$0xff]
    %v85 = vld [vmem:[#allocation5 + $0x18] sm:$0xff]
    %v86 = vld [vmem:[#allocation5 + $0x20] sm:$0xff]
    %v87 = vld [vmem:[#allocation5 + $0x28] sm:$0xff]
    %v88 = vld [vmem:[#allocation5 + $0x30] sm:$0xff]
    %v89 = vld [vmem:[#allocation5 + $0x38] sm:$0xff]
    %v90 = vld [vmem:[#allocation5 + $0x40] sm:$0xff]
    %v91 = vld [vmem:[#allocation5 + $0x48] sm:$0xff]
    %v92 = vld [vmem:[#allocation5 + $0x50] sm:$0xff]
    %v93 = vld [vmem:[#allocation5 + $0x58] sm:$0xff]
    %v94 = vld [vmem:[#allocation5 + $0x60] sm:$0xff]
    %v95 = vld [vmem:[#allocation5 + $0x68] sm:$0xff]
    %v96 = vld [vmem:[#allocation5 + $0x70] sm:$0xff]
    %v97 = vld [vmem:[#allocation5 + $0x78] sm:$0xff]
    %v98 = vpack.c.bf16 %v83, %v82
    %v99 = vpack.c.bf16 %v85, %v84
    %v100 = vpack.c.bf16 %v87, %v86
    %v101 = vpack.c.bf16 %v89, %v88
    %v102 = vpack.c.bf16 %v91, %v90
    %v103 = vpack.c.bf16 %v93, %v92
    %v104 = vpack.c.bf16 %v95, %v94
    %v105 = vpack.c.bf16 %v97, %v96
    %v106 = vunpack.c.l.bf16 %v98
    %v107 = vunpack.c.h.bf16 %v98
    %v108 = vunpack.c.l.bf16 %v99
    %v109 = vunpack.c.h.bf16 %v99
    %v110 = vunpack.c.l.bf16 %v100
    %v111 = vunpack.c.h.bf16 %v100
    %v112 = vunpack.c.l.bf16 %v101
    %v113 = vunpack.c.h.bf16 %v101
    %v114 = vunpack.c.l.bf16 %v102
    %v115 = vunpack.c.h.bf16 %v102
    %v116 = vunpack.c.l.bf16 %v103
    %v117 = vunpack.c.h.bf16 %v103
    %v118 = vunpack.c.l.bf16 %v104
    %v119 = vunpack.c.h.bf16 %v104
    %v120 = vunpack.c.l.bf16 %v105
    %v121 = vunpack.c.h.bf16 %v105
    %v122 = vsub.f32 %v82, %v106
    %v123 = vsub.f32 %v83, %v107
    %v124 = vsub.f32 %v84, %v108
    %v125 = vsub.f32 %v85, %v109
    %v126 = vsub.f32 %v86, %v110
    %v127 = vsub.f32 %v87, %v111
    %v128 = vsub.f32 %v88, %v112
    %v129 = vsub.f32 %v89, %v113
    %v130 = vsub.f32 %v90, %v114
    %v131 = vsub.f32 %v91, %v115
    %v132 = vsub.f32 %v92, %v116
    %v133 = vsub.f32 %v93, %v117
    %v134 = vsub.f32 %v94, %v118
    %v135 = vsub.f32 %v95, %v119
    %v136 = vsub.f32 %v96, %v120
    %v137 = vsub.f32 %v97, %v121
    %v138 = vpack.c.bf16 %v123, %v122
    %v139 = vpack.c.bf16 %v125, %v124
    %v140 = vpack.c.bf16 %v127, %v126
    %v141 = vpack.c.bf16 %v129, %v128
    %v142 = vpack.c.bf16 %v131, %v130
    %v143 = vpack.c.bf16 %v133, %v132
    %v144 = vpack.c.bf16 %v135, %v134
    %v145 = vpack.c.bf16 %v137, %v136
    %v146 = vld [vmem:[#allocation7] sm:$0xff]
    %v147 = vld [vmem:[#allocation7 + $0x8] sm:$0xff]
    %v148 = vld [vmem:[#allocation8] sm:$0xff]
    %v149 = vld [vmem:[#allocation8 + $0x8] sm:$0xff]
    %v150 = vpack.c.bf16 %v147, %v146
    %v151 = vunpack.c.l.bf16 %v150
    %v152 = vunpack.c.h.bf16 %v150
    %v153 = vsub.f32 %v146, %v151
    %v154 = vsub.f32 %v147, %v152
    %v155 = vpack.c.bf16 %v154, %v153
    %156 = vmatprep.subr.bf16.mxu0 0
    %157 = vmatpush1.bf16.msra.mxu0 %v138
    %158 = vmatprep.subr.bf16.mxu0 0
    %159 = vmatpush1.bf16.msra.mxu0 %v139
    %160 = vmatprep.subr.bf16.mxu0 0
    %161 = vmatpush1.bf16.msra.mxu0 %v140
    %162 = vmatprep.subr.bf16.mxu0 0
    %163 = vmatpush1.bf16.msra.mxu0 %v141
    %164 = vmatprep.subr.bf16.mxu0 0
    %165 = vmatpush1.bf16.msra.mxu0 %v142
    %166 = vmatprep.subr.bf16.mxu0 0
    %167 = vmatpush1.bf16.msra.mxu0 %v143
    %168 = vmatprep.subr.bf16.mxu0 0
    %169 = vmatpush1.bf16.msra.mxu0 %v144
    %170 = vmatprep.subr.bf16.mxu0 0
    %171 = vmatpush1.bf16.msra.mxu0 %v145
    %172 = vmatprep.subr.bf16.mxu0 0
    %173 = vmatpush1.bf16.msra.mxu0 0
    %174 = vmatprep.subr.bf16.mxu0 0
    %175 = vmatpush1.bf16.msra.mxu0 0
    %176 = vmatprep.subr.bf16.mxu0 0
    %177 = vmatpush1.bf16.msra.mxu0 0
    %178 = vmatprep.subr.bf16.mxu0 0
    %179 = vmatpush1.bf16.msra.mxu0 0
    %180 = vmatprep.subr.bf16.mxu0 0
    %181 = vmatpush1.bf16.msra.mxu0 0
    %182 = vmatprep.subr.bf16.mxu0 0
    %183 = vmatpush1.bf16.msra.mxu0 0
    %184 = vmatprep.subr.bf16.mxu0 0
    %185 = vmatpush1.bf16.msra.mxu0 0
    %186 = vmatprep.subr.bf16.mxu0 0
    %187 = vmatpush1.bf16.msra.mxu0 0
    %188 = vmatprep.mubr.bf16.mxu0 0
    %189 = vmatmul.mubr.bf16.gmra.mrb[0].mxu0 %v150
    %v190 = vpop.f32.mrb[0].mxu0
    %v191 = vadd.f32 0.0, %v190
    %v192 = vpop.f32.mrb[0].mxu0
    %v193 = vpop.f32.mrb[0].mxu0
    %v194 = vadd.f32 0.0, %v193
    %v195 = vpop.f32.mrb[0].mxu0
    %196 = vdwg.mxu0
    %197 = vmatprep.subr.bf16.mxu0 0
    %198 = vmatpush1.bf16.msra.mxu0 %v98
    %199 = vmatprep.subr.bf16.mxu0 0
    %200 = vmatpush1.bf16.msra.mxu0 %v99
    %201 = vmatprep.subr.bf16.mxu0 0
    %202 = vmatpush1.bf16.msra.mxu0 %v100
    %203 = vmatprep.subr.bf16.mxu0 0
    %204 = vmatpush1.bf16.msra.mxu0 %v101
    %205 = vmatprep.subr.bf16.mxu0 0
    %206 = vmatpush1.bf16.msra.mxu0 %v102
    %207 = vmatprep.subr.bf16.mxu0 0
    %208 = vmatpush1.bf16.msra.mxu0 %v103
    %209 = vmatprep.subr.bf16.mxu0 0
    %210 = vmatpush1.bf16.msra.mxu0 %v104
    %211 = vmatprep.subr.bf16.mxu0 0
    %212 = vmatpush1.bf16.msra.mxu0 %v105
    %213 = vmatprep.subr.bf16.mxu0 0
    %214 = vmatpush1.bf16.msra.mxu0 0
    %215 = vmatprep.subr.bf16.mxu0 0
    %216 = vmatpush1.bf16.msra.mxu0 0
    %217 = vmatprep.subr.bf16.mxu0 0
    %218 = vmatpush1.bf16.msra.mxu0 0
    %219 = vmatprep.subr.bf16.mxu0 0
    %220 = vmatpush1.bf16.msra.mxu0 0
    %221 = vmatprep.subr.bf16.mxu0 0
    %222 = vmatpush1.bf16.msra.mxu0 0
    %223 = vmatprep.subr.bf16.mxu0 0
    %224 = vmatpush1.bf16.msra.mxu0 0
    %225 = vmatprep.subr.bf16.mxu0 0
    %226 = vmatpush1.bf16.msra.mxu0 0
    %227 = vmatprep.subr.bf16.mxu0 0
    %228 = vmatpush1.bf16.msra.mxu0 0
    %229 = vmatprep.mubr.bf16.mxu0 0
    %230 = vmatmul.mubr.bf16.gmra.mrb[0].mxu0 %v150
    %v231 = vpop.f32.mrb[0].mxu0
    %v232 = vadd.f32 %v191, %v231
    %v233 = vpop.f32.mrb[0].mxu0
    %v234 = vpop.f32.mrb[0].mxu0
    %v235 = vadd.f32 %v194, %v234
    %v236 = vpop.f32.mrb[0].mxu0
    %237 = vdwg.mxu0
    %238 = vmatprep.subr.bf16.mxu0 0
    %239 = vmatpush1.bf16.msra.mxu0 %v98
    %240 = vmatprep.subr.bf16.mxu0 0
    %241 = vmatpush1.bf16.msra.mxu0 %v99
    %242 = vmatprep.subr.bf16.mxu0 0
    %243 = vmatpush1.bf16.msra.mxu0 %v100
    %244 = vmatprep.subr.bf16.mxu0 0
    %245 = vmatpush1.bf16.msra.mxu0 %v101
    %246 = vmatprep.subr.bf16.mxu0 0
    %247 = vmatpush1.bf16.msra.mxu0 %v102
    %248 = vmatprep.subr.bf16.mxu0 0
    %249 = vmatpush1.bf16.msra.mxu0 %v103
    %250 = vmatprep.subr.bf16.mxu0 0
    %251 = vmatpush1.bf16.msra.mxu0 %v104
    %252 = vmatprep.subr.bf16.mxu0 0
    %253 = vmatpush1.bf16.msra.mxu0 %v105
    %254 = vmatprep.subr.bf16.mxu0 0
    %255 = vmatpush1.bf16.msra.mxu0 0
    %256 = vmatprep.subr.bf16.mxu0 0
    %257 = vmatpush1.bf16.msra.mxu0 0
    %258 = vmatprep.subr.bf16.mxu0 0
    %259 = vmatpush1.bf16.msra.mxu0 0
    %260 = vmatprep.subr.bf16.mxu0 0
    %261 = vmatpush1.bf16.msra.mxu0 0
    %262 = vmatprep.subr.bf16.mxu0 0
    %263 = vmatpush1.bf16.msra.mxu0 0
    %264 = vmatprep.subr.bf16.mxu0 0
    %265 = vmatpush1.bf16.msra.mxu0 0
    %266 = vmatprep.subr.bf16.mxu0 0
    %267 = vmatpush1.bf16.msra.mxu0 0
    %268 = vmatprep.subr.bf16.mxu0 0
    %269 = vmatpush1.bf16.msra.mxu0 0
    %270 = vmatprep.mubr.bf16.mxu0 0
    %271 = vmatmul.mubr.bf16.gmra.mrb[0].mxu0 %v155
    %v272 = vpop.f32.mrb[0].mxu0
    %v273 = vadd.f32 0.0, %v272
    %v274 = vpop.f32.mrb[0].mxu0
    %v275 = vpop.f32.mrb[0].mxu0
    %v276 = vadd.f32 0.0, %v275
    %v277 = vpop.f32.mrb[0].mxu0
    %278 = vdwg.mxu0
    %v279 = vadd.f32 %v232, %v273
    %v280 = vadd.f32 %v235, %v276
    %v281 = vpack.c.bf16 %v280, %v279
    %v282 = vunpack.c.l.bf16 %v281
    %v283 = vunpack.c.h.bf16 %v281
    %v284 = vsub.f32 %v279, %v282
    %v285 = vsub.f32 %v280, %v283
    %v286 = vpack.c.bf16 %v285, %v284
    %vm287 = vcmask 130048
    %v289 = vsel %vm287, %v76, 0
    %291 = vmatprep.subr.bf16.mxu0 0
    %292 = vmatpush1.bf16.msra.mxu0 %v286
    %293 = vmatprep.subr.bf16.mxu0 0
    %294 = vmatpush1.bf16.msra.mxu0 0
    %295 = vmatprep.subr.bf16.mxu0 0
    %296 = vmatpush1.bf16.msra.mxu0 0
    %297 = vmatprep.subr.bf16.mxu0 0
    %298 = vmatpush1.bf16.msra.mxu0 0
    %299 = vmatprep.subr.bf16.mxu0 0
    %300 = vmatpush1.bf16.msra.mxu0 0
    %301 = vmatprep.subr.bf16.mxu0 0
    %302 = vmatpush1.bf16.msra.mxu0 0
    %303 = vmatprep.subr.bf16.mxu0 0
    %304 = vmatpush1.bf16.msra.mxu0 0
    %305 = vmatprep.subr.bf16.mxu0 0
    %306 = vmatpush1.bf16.msra.mxu0 0
    %307 = vmatprep.subr.bf16.mxu0 0
    %308 = vmatpush1.bf16.msra.mxu0 0
    %309 = vmatprep.subr.bf16.mxu0 0
    %310 = vmatpush1.bf16.msra.mxu0 0
    %311 = vmatprep.subr.bf16.mxu0 0
    %312 = vmatpush1.bf16.msra.mxu0 0
    %313 = vmatprep.subr.bf16.mxu0 0
    %314 = vmatpush1.bf16.msra.mxu0 0
    %315 = vmatprep.subr.bf16.mxu0 0
    %316 = vmatpush1.bf16.msra.mxu0 0
    %317 = vmatprep.subr.bf16.mxu0 0
    %318 = vmatpush1.bf16.msra.mxu0 0
    %319 = vmatprep.subr.bf16.mxu0 0
    %320 = vmatpush1.bf16.msra.mxu0 0
    %321 = vmatprep.subr.bf16.mxu0 0
    %322 = vmatpush1.bf16.msra.mxu0 0
    %323 = vmatprep.mubr.bf16.mxu0 0
    %324 = vmatmul.mubr.bf16.gmra.mrb[0].mxu0 %v289
    %v325 = vpop.f32.mrb[0].mxu0
    %v326 = vadd.f32 0.0, %v325
    %v327 = vpop.f32.mrb[0].mxu0
    %v328 = vpop.f32.mrb[0].mxu0
    %v329 = vadd.f32 0.0, %v328
    %v330 = vpop.f32.mrb[0].mxu0
    %331 = vdwg.mxu0
    %332 = vmatprep.subr.bf16.mxu0 0
    %333 = vmatpush1.bf16.msra.mxu0 %v281
    %334 = vmatprep.subr.bf16.mxu0 0
    %335 = vmatpush1.bf16.msra.mxu0 0
    %336 = vmatprep.subr.bf16.mxu0 0
    %337 = vmatpush1.bf16.msra.mxu0 0
    %338 = vmatprep.subr.bf16.mxu0 0
    %339 = vmatpush1.bf16.msra.mxu0 0
    %340 = vmatprep.subr.bf16.mxu0 0
    %341 = vmatpush1.bf16.msra.mxu0 0
    %342 = vmatprep.subr.bf16.mxu0 0
    %343 = vmatpush1.bf16.msra.mxu0 0
    %344 = vmatprep.subr.bf16.mxu0 0
    %345 = vmatpush1.bf16.msra.mxu0 0
    %346 = vmatprep.subr.bf16.mxu0 0
    %347 = vmatpush1.bf16.msra.mxu0 0
    %348 = vmatprep.subr.bf16.mxu0 0
    %349 = vmatpush1.bf16.msra.mxu0 0
    %350 = vmatprep.subr.bf16.mxu0 0
    %351 = vmatpush1.bf16.msra.mxu0 0
    %352 = vmatprep.subr.bf16.mxu0 0
    %353 = vmatpush1.bf16.msra.mxu0 0
    %354 = vmatprep.subr.bf16.mxu0 0
    %355 = vmatpush1.bf16.msra.mxu0 0
    %356 = vmatprep.subr.bf16.mxu0 0
    %357 = vmatpush1.bf16.msra.mxu0 0
    %358 = vmatprep.subr.bf16.mxu0 0
    %359 = vmatpush1.bf16.msra.mxu0 0
    %360 = vmatprep.subr.bf16.mxu0 0
    %361 = vmatpush1.bf16.msra.mxu0 0
    %362 = vmatprep.subr.bf16.mxu0 0
    %363 = vmatpush1.bf16.msra.mxu0 0
    %364 = vmatprep.mubr.bf16.mxu0 0
    %365 = vmatmul.mubr.bf16.gmra.mrb[0].mxu0 %v289
    %v366 = vpop.f32.mrb[0].mxu0
    %v367 = vadd.f32 %v326, %v366
    %v368 = vpop.f32.mrb[0].mxu0
    %v369 = vpop.f32.mrb[0].mxu0
    %v370 = vadd.f32 %v329, %v369
    %v371 = vpop.f32.mrb[0].mxu0
    %372 = vdwg.mxu0
    %v374 = vsel %vm287, %v81, 0
    %376 = vmatprep.subr.bf16.mxu0 0
    %377 = vmatpush1.bf16.msra.mxu0 %v281
    %378 = vmatprep.subr.bf16.mxu0 0
    %379 = vmatpush1.bf16.msra.mxu0 0
    %380 = vmatprep.subr.bf16.mxu0 0
    %381 = vmatpush1.bf16.msra.mxu0 0
    %382 = vmatprep.subr.bf16.mxu0 0
    %383 = vmatpush1.bf16.msra.mxu0 0
    %384 = vmatprep.subr.bf16.mxu0 0
    %385 = vmatpush1.bf16.msra.mxu0 0
    %386 = vmatprep.subr.bf16.mxu0 0
    %387 = vmatpush1.bf16.msra.mxu0 0
    %388 = vmatprep.subr.bf16.mxu0 0
    %389 = vmatpush1.bf16.msra.mxu0 0
    %390 = vmatprep.subr.bf16.mxu0 0
    %391 = vmatpush1.bf16.msra.mxu0 0
    %392 = vmatprep.subr.bf16.mxu0 0
    %393 = vmatpush1.bf16.msra.mxu0 0
    %394 = vmatprep.subr.bf16.mxu0 0
    %395 = vmatpush1.bf16.msra.mxu0 0
    %396 = vmatprep.subr.bf16.mxu0 0
    %397 = vmatpush1.bf16.msra.mxu0 0
    %398 = vmatprep.subr.bf16.mxu0 0
    %399 = vmatpush1.bf16.msra.mxu0 0
    %400 = vmatprep.subr.bf16.mxu0 0
    %401 = vmatpush1.bf16.msra.mxu0 0
    %402 = vmatprep.subr.bf16.mxu0 0
    %403 = vmatpush1.bf16.msra.mxu0 0
    %404 = vmatprep.subr.bf16.mxu0 0
    %405 = vmatpush1.bf16.msra.mxu0 0
    %406 = vmatprep.subr.bf16.mxu0 0
    %407 = vmatpush1.bf16.msra.mxu0 0
    %408 = vmatprep.mubr.bf16.mxu0 0
    %409 = vmatmul.mubr.bf16.gmra.mrb[0].mxu0 %v374
    %v410 = vpop.f32.mrb[0].mxu0
    %v411 = vadd.f32 0.0, %v410
    %v412 = vpop.f32.mrb[0].mxu0
    %v413 = vpop.f32.mrb[0].mxu0
    %v414 = vadd.f32 0.0, %v413
    %v415 = vpop.f32.mrb[0].mxu0
    %416 = vdwg.mxu0
    %v417 = vadd.f32 %v367, %v411
    %v418 = vadd.f32 %v370, %v414
    %v419 = vpack.c.bf16 %v149, %v148
    %v420 = vunpack.c.l.bf16 %v419
    %v421 = vunpack.c.h.bf16 %v419
    %v422 = vsub.f32 %v148, %v420
    %v423 = vsub.f32 %v149, %v421
    %v424 = vpack.c.bf16 %v423, %v422
    %425 = vmatprep.subr.bf16.mxu0 0
    %426 = vmatpush1.bf16.msra.mxu0 %v138
    %427 = vmatprep.subr.bf16.mxu0 0
    %428 = vmatpush1.bf16.msra.mxu0 %v139
    %429 = vmatprep.subr.bf16.mxu0 0
    %430 = vmatpush1.bf16.msra.mxu0 %v140
    %431 = vmatprep.subr.bf16.mxu0 0
    %432 = vmatpush1.bf16.msra.mxu0 %v141
    %433 = vmatprep.subr.bf16.mxu0 0
    %434 = vmatpush1.bf16.msra.mxu0 %v142
    %435 = vmatprep.subr.bf16.mxu0 0
    %436 = vmatpush1.bf16.msra.mxu0 %v143
    %437 = vmatprep.subr.bf16.mxu0 0
    %438 = vmatpush1.bf16.msra.mxu0 %v144
    %439 = vmatprep.subr.bf16.mxu0 0
    %440 = vmatpush1.bf16.msra.mxu0 %v145
    %441 = vmatprep.subr.bf16.mxu0 0
    %442 = vmatpush1.bf16.msra.mxu0 0
    %443 = vmatprep.subr.bf16.mxu0 0
    %444 = vmatpush1.bf16.msra.mxu0 0
    %445 = vmatprep.subr.bf16.mxu0 0
    %446 = vmatpush1.bf16.msra.mxu0 0
    %447 = vmatprep.subr.bf16.mxu0 0
    %448 = vmatpush1.bf16.msra.mxu0 0
    %449 = vmatprep.subr.bf16.mxu0 0
    %450 = vmatpush1.bf16.msra.mxu0 0
    %451 = vmatprep.subr.bf16.mxu0 0
    %452 = vmatpush1.bf16.msra.mxu0 0
    %453 = vmatprep.subr.bf16.mxu0 0
    %454 = vmatpush1.bf16.msra.mxu0 0
    %455 = vmatprep.subr.bf16.mxu0 0
    %456 = vmatpush1.bf16.msra.mxu0 0
    %457 = vmatprep.mubr.bf16.mxu0 0
    %458 = vmatmul.mubr.bf16.gmra.mrb[0].mxu0 %v419
    %v459 = vpop.f32.mrb[0].mxu0
    %v460 = vadd.f32 0.0, %v459
    %v461 = vpop.f32.mrb[0].mxu0
    %v462 = vpop.f32.mrb[0].mxu0
    %v463 = vadd.f32 0.0, %v462
    %v464 = vpop.f32.mrb[0].mxu0
    %465 = vdwg.mxu0
    %466 = vmatprep.subr.bf16.mxu0 0
    %467 = vmatpush1.bf16.msra.mxu0 %v98
    %468 = vmatprep.subr.bf16.mxu0 0
    %469 = vmatpush1.bf16.msra.mxu0 %v99
    %470 = vmatprep.subr.bf16.mxu0 0
    %471 = vmatpush1.bf16.msra.mxu0 %v100
    %472 = vmatprep.subr.bf16.mxu0 0
    %473 = vmatpush1.bf16.msra.mxu0 %v101
    %474 = vmatprep.subr.bf16.mxu0 0
    %475 = vmatpush1.bf16.msra.mxu0 %v102
    %476 = vmatprep.subr.bf16.mxu0 0
    %477 = vmatpush1.bf16.msra.mxu0 %v103
    %478 = vmatprep.subr.bf16.mxu0 0
    %479 = vmatpush1.bf16.msra.mxu0 %v104
    %480 = vmatprep.subr.bf16.mxu0 0
    %481 = vmatpush1.bf16.msra.mxu0 %v105
    %482 = vmatprep.subr.bf16.mxu0 0
    %483 = vmatpush1.bf16.msra.mxu0 0
    %484 = vmatprep.subr.bf16.mxu0 0
    %485 = vmatpush1.bf16.msra.mxu0 0
    %486 = vmatprep.subr.bf16.mxu0 0
    %487 = vmatpush1.bf16.msra.mxu0 0
    %488 = vmatprep.subr.bf16.mxu0 0
    %489 = vmatpush1.bf16.msra.mxu0 0
    %490 = vmatprep.subr.bf16.mxu0 0
    %491 = vmatpush1.bf16.msra.mxu0 0
    %492 = vmatprep.subr.bf16.mxu0 0
    %493 = vmatpush1.bf16.msra.mxu0 0
    %494 = vmatprep.subr.bf16.mxu0 0
    %495 = vmatpush1.bf16.msra.mxu0 0
    %496 = vmatprep.subr.bf16.mxu0 0
    %497 = vmatpush1.bf16.msra.mxu0 0
    %498 = vmatprep.mubr.bf16.mxu0 0
    %499 = vmatmul.mubr.bf16.gmra.mrb[0].mxu0 %v419
    %v500 = vpop.f32.mrb[0].mxu0
    %v501 = vadd.f32 %v460, %v500
    %v502 = vpop.f32.mrb[0].mxu0
    %v503 = vpop.f32.mrb[0].mxu0
    %v504 = vadd.f32 %v463, %v503
    %v505 = vpop.f32.mrb[0].mxu0
    %506 = vdwg.mxu0
    %507 = vmatprep.subr.bf16.mxu0 0
    %508 = vmatpush1.bf16.msra.mxu0 %v98
    %509 = vmatprep.subr.bf16.mxu0 0
    %510 = vmatpush1.bf16.msra.mxu0 %v99
    %511 = vmatprep.subr.bf16.mxu0 0
    %512 = vmatpush1.bf16.msra.mxu0 %v100
    %513 = vmatprep.subr.bf16.mxu0 0
    %514 = vmatpush1.bf16.msra.mxu0 %v101
    %515 = vmatprep.subr.bf16.mxu0 0
    %516 = vmatpush1.bf16.msra.mxu0 %v102
    %517 = vmatprep.subr.bf16.mxu0 0
    %518 = vmatpush1.bf16.msra.mxu0 %v103
    %519 = vmatprep.subr.bf16.mxu0 0
    %520 = vmatpush1.bf16.msra.mxu0 %v104
    %521 = vmatprep.subr.bf16.mxu0 0
    %522 = vmatpush1.bf16.msra.mxu0 %v105
    %523 = vmatprep.subr.bf16.mxu0 0
    %524 = vmatpush1.bf16.msra.mxu0 0
    %525 = vmatprep.subr.bf16.mxu0 0
    %526 = vmatpush1.bf16.msra.mxu0 0
    %527 = vmatprep.subr.bf16.mxu0 0
    %528 = vmatpush1.bf16.msra.mxu0 0
    %529 = vmatprep.subr.bf16.mxu0 0
    %530 = vmatpush1.bf16.msra.mxu0 0
    %531 = vmatprep.subr.bf16.mxu0 0
    %532 = vmatpush1.bf16.msra.mxu0 0
    %533 = vmatprep.subr.bf16.mxu0 0
    %534 = vmatpush1.bf16.msra.mxu0 0
    %535 = vmatprep.subr.bf16.mxu0 0
    %536 = vmatpush1.bf16.msra.mxu0 0
    %537 = vmatprep.subr.bf16.mxu0 0
    %538 = vmatpush1.bf16.msra.mxu0 0
    %539 = vmatprep.mubr.bf16.mxu0 0
    %540 = vmatmul.mubr.bf16.gmra.mrb[0].mxu0 %v424
    %v541 = vpop.f32.mrb[0].mxu0
    %v542 = vadd.f32 0.0, %v541
    %v543 = vpop.f32.mrb[0].mxu0
    %v544 = vpop.f32.mrb[0].mxu0
    %v545 = vadd.f32 0.0, %v544
    %v546 = vpop.f32.mrb[0].mxu0
    %547 = vdwg.mxu0
    %v548 = vadd.f32 %v501, %v542
    %v549 = vadd.f32 %v504, %v545
    %v550 = vpack.c.bf16 %v549, %v548
    %v551 = vunpack.c.l.bf16 %v550
    %v552 = vunpack.c.h.bf16 %v550
    %v553 = vsub.f32 %v548, %v551
    %v554 = vsub.f32 %v549, %v552
    %v555 = vpack.c.bf16 %v554, %v553
    %556 = vmatprep.subr.bf16.mxu0 0
    %557 = vmatpush1.bf16.msra.mxu0 %v555
    %558 = vmatprep.subr.bf16.mxu0 0
    %559 = vmatpush1.bf16.msra.mxu0 0
    %560 = vmatprep.subr.bf16.mxu0 0
    %561 = vmatpush1.bf16.msra.mxu0 0
    %562 = vmatprep.subr.bf16.mxu0 0
    %563 = vmatpush1.bf16.msra.mxu0 0
    %564 = vmatprep.subr.bf16.mxu0 0
    %565 = vmatpush1.bf16.msra.mxu0 0
    %566 = vmatprep.subr.bf16.mxu0 0
    %567 = vmatpush1.bf16.msra.mxu0 0
    %568 = vmatprep.subr.bf16.mxu0 0
    %569 = vmatpush1.bf16.msra.mxu0 0
    %570 = vmatprep.subr.bf16.mxu0 0
    %571 = vmatpush1.bf16.msra.mxu0 0
    %572 = vmatprep.subr.bf16.mxu0 0
    %573 = vmatpush1.bf16.msra.mxu0 0
    %574 = vmatprep.subr.bf16.mxu0 0
    %575 = vmatpush1.bf16.msra.mxu0 0
    %576 = vmatprep.subr.bf16.mxu0 0
    %577 = vmatpush1.bf16.msra.mxu0 0
    %578 = vmatprep.subr.bf16.mxu0 0
    %579 = vmatpush1.bf16.msra.mxu0 0
    %580 = vmatprep.subr.bf16.mxu0 0
    %581 = vmatpush1.bf16.msra.mxu0 0
    %582 = vmatprep.subr.bf16.mxu0 0
    %583 = vmatpush1.bf16.msra.mxu0 0
    %584 = vmatprep.subr.bf16.mxu0 0
    %585 = vmatpush1.bf16.msra.mxu0 0
    %586 = vmatprep.subr.bf16.mxu0 0
    %587 = vmatpush1.bf16.msra.mxu0 0
    %588 = vmatprep.mubr.bf16.mxu0 0
    %589 = vmatmul.mubr.bf16.gmra.mrb[0].mxu0 %v289
    %v590 = vpop.f32.mrb[0].mxu0
    %v591 = vadd.f32 0.0, %v590
    %v592 = vpop.f32.mrb[0].mxu0
    %v593 = vpop.f32.mrb[0].mxu0
    %v594 = vadd.f32 0.0, %v593
    %v595 = vpop.f32.mrb[0].mxu0
    %596 = vdwg.mxu0
    %597 = vmatprep.subr.bf16.mxu0 0
    %598 = vmatpush1.bf16.msra.mxu0 %v550
    %599 = vmatprep.subr.bf16.mxu0 0
    %600 = vmatpush1.bf16.msra.mxu0 0
    %601 = vmatprep.subr.bf16.mxu0 0
    %602 = vmatpush1.bf16.msra.mxu0 0
    %603 = vmatprep.subr.bf16.mxu0 0
    %604 = vmatpush1.bf16.msra.mxu0 0
    %605 = vmatprep.subr.bf16.mxu0 0
    %606 = vmatpush1.bf16.msra.mxu0 0
    %607 = vmatprep.subr.bf16.mxu0 0
    %608 = vmatpush1.bf16.msra.mxu0 0
    %609 = vmatprep.subr.bf16.mxu0 0
    %610 = vmatpush1.bf16.msra.mxu0 0
    %611 = vmatprep.subr.bf16.mxu0 0
    %612 = vmatpush1.bf16.msra.mxu0 0
    %613 = vmatprep.subr.bf16.mxu0 0
    %614 = vmatpush1.bf16.msra.mxu0 0
    %615 = vmatprep.subr.bf16.mxu0 0
    %616 = vmatpush1.bf16.msra.mxu0 0
    %617 = vmatprep.subr.bf16.mxu0 0
    %618 = vmatpush1.bf16.msra.mxu0 0
    %619 = vmatprep.subr.bf16.mxu0 0
    %620 = vmatpush1.bf16.msra.mxu0 0
    %621 = vmatprep.subr.bf16.mxu0 0
    %622 = vmatpush1.bf16.msra.mxu0 0
    %623 = vmatprep.subr.bf16.mxu0 0
    %624 = vmatpush1.bf16.msra.mxu0 0
    %625 = vmatprep.subr.bf16.mxu0 0
    %626 = vmatpush1.bf16.msra.mxu0 0
    %627 = vmatprep.subr.bf16.mxu0 0
    %628 = vmatpush1.bf16.msra.mxu0 0
    %629 = vmatprep.mubr.bf16.mxu0 0
    %630 = vmatmul.mubr.bf16.gmra.mrb[0].mxu0 %v289
    %v631 = vpop.f32.mrb[0].mxu0
    %v632 = vadd.f32 %v591, %v631
    %v633 = vpop.f32.mrb[0].mxu0
    %v634 = vpop.f32.mrb[0].mxu0
    %v635 = vadd.f32 %v594, %v634
    %v636 = vpop.f32.mrb[0].mxu0
    %637 = vdwg.mxu0
    %638 = vmatprep.subr.bf16.mxu0 0
    %639 = vmatpush1.bf16.msra.mxu0 %v550
    %640 = vmatprep.subr.bf16.mxu0 0
    %641 = vmatpush1.bf16.msra.mxu0 0
    %642 = vmatprep.subr.bf16.mxu0 0
    %643 = vmatpush1.bf16.msra.mxu0 0
    %644 = vmatprep.subr.bf16.mxu0 0
    %645 = vmatpush1.bf16.msra.mxu0 0
    %646 = vmatprep.subr.bf16.mxu0 0
    %647 = vmatpush1.bf16.msra.mxu0 0
    %648 = vmatprep.subr.bf16.mxu0 0
    %649 = vmatpush1.bf16.msra.mxu0 0
    %650 = vmatprep.subr.bf16.mxu0 0
    %651 = vmatpush1.bf16.msra.mxu0 0
    %652 = vmatprep.subr.bf16.mxu0 0
    %653 = vmatpush1.bf16.msra.mxu0 0
    %654 = vmatprep.subr.bf16.mxu0 0
    %655 = vmatpush1.bf16.msra.mxu0 0
    %656 = vmatprep.subr.bf16.mxu0 0
    %657 = vmatpush1.bf16.msra.mxu0 0
    %658 = vmatprep.subr.bf16.mxu0 0
    %659 = vmatpush1.bf16.msra.mxu0 0
    %660 = vmatprep.subr.bf16.mxu0 0
    %661 = vmatpush1.bf16.msra.mxu0 0
    %662 = vmatprep.subr.bf16.mxu0 0
    %663 = vmatpush1.bf16.msra.mxu0 0
    %664 = vmatprep.subr.bf16.mxu0 0
    %665 = vmatpush1.bf16.msra.mxu0 0
    %666 = vmatprep.subr.bf16.mxu0 0
    %667 = vmatpush1.bf16.msra.mxu0 0
    %668 = vmatprep.subr.bf16.mxu0 0
    %669 = vmatpush1.bf16.msra.mxu0 0
    %670 = vmatprep.mubr.bf16.mxu0 0
    %671 = vmatmul.mubr.bf16.gmra.mrb[0].mxu0 %v374
    %v672 = vpop.f32.mrb[0].mxu0
    %v673 = vadd.f32 0.0, %v672
    %v674 = vpop.f32.mrb[0].mxu0
    %v675 = vpop.f32.mrb[0].mxu0
    %v676 = vadd.f32 0.0, %v675
    %v677 = vpop.f32.mrb[0].mxu0
    %678 = vdwg.mxu0
    %v679 = vadd.f32 %v632, %v673
    %v680 = vadd.f32 %v635, %v676
    %v681 = vmul.f32 %v417, %v417
    %v682 = vmul.f32 %v418, %v418
    %v683 = vmul.f32 %v679, %v679
    %v684 = vmul.f32 %v680, %v680
    %v685 = vmul.f32 %v417, %v679
    %v686 = vmul.f32 %v418, %v680
    %v687 = vmul.f32 %v146, %v148
    %v688 = vmul.f32 %v147, %v149
    %v689 = vpack.c.bf16 %v688, %v687
    %v690 = vunpack.c.l.bf16 %v689
    %v691 = vunpack.c.h.bf16 %v689
    %v692 = vsub.f32 %v687, %v690
    %v693 = vsub.f32 %v688, %v691
    %v694 = vpack.c.bf16 %v693, %v692
    %695 = vmatprep.subr.bf16.mxu0 0
    %696 = vmatpush1.bf16.msra.mxu0 %v138
    %697 = vmatprep.subr.bf16.mxu0 0
    %698 = vmatpush1.bf16.msra.mxu0 %v139
    %699 = vmatprep.subr.bf16.mxu0 0
    %700 = vmatpush1.bf16.msra.mxu0 %v140
    %701 = vmatprep.subr.bf16.mxu0 0
    %702 = vmatpush1.bf16.msra.mxu0 %v141
    %703 = vmatprep.subr.bf16.mxu0 0
    %704 = vmatpush1.bf16.msra.mxu0 %v142
    %705 = vmatprep.subr.bf16.mxu0 0
    %706 = vmatpush1.bf16.msra.mxu0 %v143
    %707 = vmatprep.subr.bf16.mxu0 0
    %708 = vmatpush1.bf16.msra.mxu0 %v144
    %709 = vmatprep.subr.bf16.mxu0 0
    %710 = vmatpush1.bf16.msra.mxu0 %v145
    %711 = vmatprep.subr.bf16.mxu0 0
    %712 = vmatpush1.bf16.msra.mxu0 0
    %713 = vmatprep.subr.bf16.mxu0 0
    %714 = vmatpush1.bf16.msra.mxu0 0
    %715 = vmatprep.subr.bf16.mxu0 0
    %716 = vmatpush1.bf16.msra.mxu0 0
    %717 = vmatprep.subr.bf16.mxu0 0
    %718 = vmatpush1.bf16.msra.mxu0 0
    %719 = vmatprep.subr.bf16.mxu0 0
    %720 = vmatpush1.bf16.msra.mxu0 0
    %721 = vmatprep.subr.bf16.mxu0 0
    %722 = vmatpush1.bf16.msra.mxu0 0
    %723 = vmatprep.subr.bf16.mxu0 0
    %724 = vmatpush1.bf16.msra.mxu0 0
    %725 = vmatprep.subr.bf16.mxu0 0
    %726 = vmatpush1.bf16.msra.mxu0 0
    %727 = vmatprep.mubr.bf16.mxu0 0
    %728 = vmatmul.mubr.bf16.gmra.mrb[0].mxu0 %v689
    %v729 = vpop.f32.mrb[0].mxu0
    %v730 = vadd.f32 0.0, %v729
    %v731 = vpop.f32.mrb[0].mxu0
    %v732 = vpop.f32.mrb[0].mxu0
    %v733 = vadd.f32 0.0, %v732
    %v734 = vpop.f32.mrb[0].mxu0
    %735 = vdwg.mxu0
    %736 = vmatprep.subr.bf16.mxu0 0
    %737 = vmatpush1.bf16.msra.mxu0 %v98
    %738 = vmatprep.subr.bf16.mxu0 0
    %739 = vmatpush1.bf16.msra.mxu0 %v99
    %740 = vmatprep.subr.bf16.mxu0 0
    %741 = vmatpush1.bf16.msra.mxu0 %v100
    %742 = vmatprep.subr.bf16.mxu0 0
    %743 = vmatpush1.bf16.msra.mxu0 %v101
    %744 = vmatprep.subr.bf16.mxu0 0
    %745 = vmatpush1.bf16.msra.mxu0 %v102
    %746 = vmatprep.subr.bf16.mxu0 0
    %747 = vmatpush1.bf16.msra.mxu0 %v103
    %748 = vmatprep.subr.bf16.mxu0 0
    %749 = vmatpush1.bf16.msra.mxu0 %v104
    %750 = vmatprep.subr.bf16.mxu0 0
    %751 = vmatpush1.bf16.msra.mxu0 %v105
    %752 = vmatprep.subr.bf16.mxu0 0
    %753 = vmatpush1.bf16.msra.mxu0 0
    %754 = vmatprep.subr.bf16.mxu0 0
    %755 = vmatpush1.bf16.msra.mxu0 0
    %756 = vmatprep.subr.bf16.mxu0 0
    %757 = vmatpush1.bf16.msra.mxu0 0
    %758 = vmatprep.subr.bf16.mxu0 0
    %759 = vmatpush1.bf16.msra.mxu0 0
    %760 = vmatprep.subr.bf16.mxu0 0
    %761 = vmatpush1.bf16.msra.mxu0 0
    %762 = vmatprep.subr.bf16.mxu0 0
    %763 = vmatpush1.bf16.msra.mxu0 0
    %764 = vmatprep.subr.bf16.mxu0 0
    %765 = vmatpush1.bf16.msra.mxu0 0
    %766 = vmatprep.subr.bf16.mxu0 0
    %767 = vmatpush1.bf16.msra.mxu0 0
    %768 = vmatprep.mubr.bf16.mxu0 0
    %769 = vmatmul.mubr.bf16.gmra.mrb[0].mxu0 %v689
    %v770 = vpop.f32.mrb[0].mxu0
    %v771 = vadd.f32 %v730, %v770
    %v772 = vpop.f32.mrb[0].mxu0
    %v773 = vpop.f32.mrb[0].mxu0
    %v774 = vadd.f32 %v733, %v773
    %v775 = vpop.f32.mrb[0].mxu0
    %776 = vdwg.mxu0
    %777 = vmatprep.subr.bf16.mxu0 0
    %778 = vmatpush1.bf16.msra.mxu0 %v98
    %779 = vmatprep.subr.bf16.mxu0 0
    %780 = vmatpush1.bf16.msra.mxu0 %v99
    %781 = vmatprep.subr.bf16.mxu0 0
    %782 = vmatpush1.bf16.msra.mxu0 %v100
    %783 = vmatprep.subr.bf16.mxu0 0
    %784 = vmatpush1.bf16.msra.mxu0 %v101
    %785 = vmatprep.subr.bf16.mxu0 0
    %786 = vmatpush1.bf16.msra.mxu0 %v102
    %787 = vmatprep.subr.bf16.mxu0 0
    %788 = vmatpush1.bf16.msra.mxu0 %v103
    %789 = vmatprep.subr.bf16.mxu0 0
    %790 = vmatpush1.bf16.msra.mxu0 %v104
    %791 = vmatprep.subr.bf16.mxu0 0
    %792 = vmatpush1.bf16.msra.mxu0 %v105
    %793 = vmatprep.subr.bf16.mxu0 0
    %794 = vmatpush1.bf16.msra.mxu0 0
    %795 = vmatprep.subr.bf16.mxu0 0
    %796 = vmatpush1.bf16.msra.mxu0 0
    %797 = vmatprep.subr.bf16.mxu0 0
    %798 = vmatpush1.bf16.msra.mxu0 0
    %799 = vmatprep.subr.bf16.mxu0 0
    %800 = vmatpush1.bf16.msra.mxu0 0
    %801 = vmatprep.subr.bf16.mxu0 0
    %802 = vmatpush1.bf16.msra.mxu0 0
    %803 = vmatprep.subr.bf16.mxu0 0
    %804 = vmatpush1.bf16.msra.mxu0 0
    %805 = vmatprep.subr.bf16.mxu0 0
    %806 = vmatpush1.bf16.msra.mxu0 0
    %807 = vmatprep.subr.bf16.mxu0 0
    %808 = vmatpush1.bf16.msra.mxu0 0
    %809 = vmatprep.mubr.bf16.mxu0 0
    %810 = vmatmul.mubr.bf16.gmra.mrb[0].mxu0 %v694
    %v811 = vpop.f32.mrb[0].mxu0
    %v812 = vadd.f32 0.0, %v811
    %v813 = vpop.f32.mrb[0].mxu0
    %v814 = vpop.f32.mrb[0].mxu0
    %v815 = vadd.f32 0.0, %v814
    %v816 = vpop.f32.mrb[0].mxu0
    %817 = vdwg.mxu0
    %v818 = vadd.f32 %v771, %v812
    %v819 = vadd.f32 %v774, %v815
    %v820 = vpack.c.bf16 %v819, %v818
    %v821 = vunpack.c.l.bf16 %v820
    %v822 = vunpack.c.h.bf16 %v820
    %v823 = vsub.f32 %v818, %v821
    %v824 = vsub.f32 %v819, %v822
    %v825 = vpack.c.bf16 %v824, %v823
    %826 = vmatprep.subr.bf16.mxu0 0
    %827 = vmatpush1.bf16.msra.mxu0 %v825
    %828 = vmatprep.subr.bf16.mxu0 0
    %829 = vmatpush1.bf16.msra.mxu0 0
    %830 = vmatprep.subr.bf16.mxu0 0
    %831 = vmatpush1.bf16.msra.mxu0 0
    %832 = vmatprep.subr.bf16.mxu0 0
    %833 = vmatpush1.bf16.msra.mxu0 0
    %834 = vmatprep.subr.bf16.mxu0 0
    %835 = vmatpush1.bf16.msra.mxu0 0
    %836 = vmatprep.subr.bf16.mxu0 0
    %837 = vmatpush1.bf16.msra.mxu0 0
    %838 = vmatprep.subr.bf16.mxu0 0
    %839 = vmatpush1.bf16.msra.mxu0 0
    %840 = vmatprep.subr.bf16.mxu0 0
    %841 = vmatpush1.bf16.msra.mxu0 0
    %842 = vmatprep.subr.bf16.mxu0 0
    %843 = vmatpush1.bf16.msra.mxu0 0
    %844 = vmatprep.subr.bf16.mxu0 0
    %845 = vmatpush1.bf16.msra.mxu0 0
    %846 = vmatprep.subr.bf16.mxu0 0
    %847 = vmatpush1.bf16.msra.mxu0 0
    %848 = vmatprep.subr.bf16.mxu0 0
    %849 = vmatpush1.bf16.msra.mxu0 0
    %850 = vmatprep.subr.bf16.mxu0 0
    %851 = vmatpush1.bf16.msra.mxu0 0
    %852 = vmatprep.subr.bf16.mxu0 0
    %853 = vmatpush1.bf16.msra.mxu0 0
    %854 = vmatprep.subr.bf16.mxu0 0
    %855 = vmatpush1.bf16.msra.mxu0 0
    %856 = vmatprep.subr.bf16.mxu0 0
    %857 = vmatpush1.bf16.msra.mxu0 0
    %858 = vmatprep.mubr.bf16.mxu0 0
    %859 = vmatmul.mubr.bf16.gmra.mrb[0].mxu0 %v289
    %v860 = vpop.f32.mrb[0].mxu0
    %v861 = vadd.f32 0.0, %v860
    %v862 = vpop.f32.mrb[0].mxu0
    %v863 = vpop.f32.mrb[0].mxu0
    %v864 = vadd.f32 0.0, %v863
    %v865 = vpop.f32.mrb[0].mxu0
    %866 = vdwg.mxu0
    %867 = vmatprep.subr.bf16.mxu0 0
    %868 = vmatpush1.bf16.msra.mxu0 %v820
    %869 = vmatprep.subr.bf16.mxu0 0
    %870 = vmatpush1.bf16.msra.mxu0 0
    %871 = vmatprep.subr.bf16.mxu0 0
    %872 = vmatpush1.bf16.msra.mxu0 0
    %873 = vmatprep.subr.bf16.mxu0 0
    %874 = vmatpush1.bf16.msra.mxu0 0
    %875 = vmatprep.subr.bf16.mxu0 0
    %876 = vmatpush1.bf16.msra.mxu0 0
    %877 = vmatprep.subr.bf16.mxu0 0
    %878 = vmatpush1.bf16.msra.mxu0 0
    %879 = vmatprep.subr.bf16.mxu0 0
    %880 = vmatpush1.bf16.msra.mxu0 0
    %881 = vmatprep.subr.bf16.mxu0 0
    %882 = vmatpush1.bf16.msra.mxu0 0
    %883 = vmatprep.subr.bf16.mxu0 0
    %884 = vmatpush1.bf16.msra.mxu0 0
    %885 = vmatprep.subr.bf16.mxu0 0
    %886 = vmatpush1.bf16.msra.mxu0 0
    %887 = vmatprep.subr.bf16.mxu0 0
    %888 = vmatpush1.bf16.msra.mxu0 0
    %889 = vmatprep.subr.bf16.mxu0 0
    %890 = vmatpush1.bf16.msra.mxu0 0
    %891 = vmatprep.subr.bf16.mxu0 0
    %892 = vmatpush1.bf16.msra.mxu0 0
    %893 = vmatprep.subr.bf16.mxu0 0
    %894 = vmatpush1.bf16.msra.mxu0 0
    %895 = vmatprep.subr.bf16.mxu0 0
    %896 = vmatpush1.bf16.msra.mxu0 0
    %897 = vmatprep.subr.bf16.mxu0 0
    %898 = vmatpush1.bf16.msra.mxu0 0
    %899 = vmatprep.mubr.bf16.mxu0 0
    %900 = vmatmul.mubr.bf16.gmra.mrb[0].mxu0 %v289
    %v901 = vpop.f32.mrb[0].mxu0
    %v902 = vadd.f32 %v861, %v901
    %v903 = vpop.f32.mrb[0].mxu0
    %v904 = vpop.f32.mrb[0].mxu0
    %v905 = vadd.f32 %v864, %v904
    %v906 = vpop.f32.mrb[0].mxu0
    %907 = vdwg.mxu0
    %908 = vmatprep.subr.bf16.mxu0 0
    %909 = vmatpush1.bf16.msra.mxu0 %v820
    %910 = vmatprep.subr.bf16.mxu0 0
    %911 = vmatpush1.bf16.msra.mxu0 0
    %912 = vmatprep.subr.bf16.mxu0 0
    %913 = vmatpush1.bf16.msra.mxu0 0
    %914 = vmatprep.subr.bf16.mxu0 0
    %915 = vmatpush1.bf16.msra.mxu0 0
    %916 = vmatprep.subr.bf16.mxu0 0
    %917 = vmatpush1.bf16.msra.mxu0 0
    %918 = vmatprep.subr.bf16.mxu0 0
    %919 = vmatpush1.bf16.msra.mxu0 0
    %920 = vmatprep.subr.bf16.mxu0 0
    %921 = vmatpush1.bf16.msra.mxu0 0
    %922 = vmatprep.subr.bf16.mxu0 0
    %923 = vmatpush1.bf16.msra.mxu0 0
    %924 = vmatprep.subr.bf16.mxu0 0
    %925 = vmatpush1.bf16.msra.mxu0 0
    %926 = vmatprep.subr.bf16.mxu0 0
    %927 = vmatpush1.bf16.msra.mxu0 0
    %928 = vmatprep.subr.bf16.mxu0 0
    %929 = vmatpush1.bf16.msra.mxu0 0
    %930 = vmatprep.subr.bf16.mxu0 0
    %931 = vmatpush1.bf16.msra.mxu0 0
    %932 = vmatprep.subr.bf16.mxu0 0
    %933 = vmatpush1.bf16.msra.mxu0 0
    %934 = vmatprep.subr.bf16.mxu0 0
    %935 = vmatpush1.bf16.msra.mxu0 0
    %936 = vmatprep.subr.bf16.mxu0 0
    %937 = vmatpush1.bf16.msra.mxu0 0
    %938 = vmatprep.subr.bf16.mxu0 0
    %939 = vmatpush1.bf16.msra.mxu0 0
    %940 = vmatprep.mubr.bf16.mxu0 0
    %941 = vmatmul.mubr.bf16.gmra.mrb[0].mxu0 %v374
    %v942 = vpop.f32.mrb[0].mxu0
    %v943 = vadd.f32 0.0, %v942
    %v944 = vpop.f32.mrb[0].mxu0
    %v945 = vpop.f32.mrb[0].mxu0
    %v946 = vadd.f32 0.0, %v945
    %v947 = vpop.f32.mrb[0].mxu0
    %948 = vdwg.mxu0
    %v949 = vadd.f32 %v902, %v943
    %v950 = vadd.f32 %v905, %v946
    %v951 = vsub.f32 %v949, %v685
    %v952 = vsub.f32 %v950, %v686
    %v953 = vmul.f32 %v685, 2.0
    %v954 = vmul.f32 %v686, 2.0
    %v955 = vadd.f32 %v953, 0.0001
    %v956 = vadd.f32 %v954, 0.0001
    %v957 = vmul.f32 %v951, 2.0
    %v958 = vmul.f32 %v952, 2.0
    %v959 = vadd.f32 %v957, 0.0009
    %v960 = vadd.f32 %v958, 0.0009
    %v961 = vmul.f32 %v955, %v959
    %v962 = vmul.f32 %v956, %v960
    %v963 = vmul.f32 %v146, %v146
    %v964 = vmul.f32 %v147, %v147
    %v965 = vpack.c.bf16 %v964, %v963
    %v966 = vunpack.c.l.bf16 %v965
    %v967 = vunpack.c.h.bf16 %v965
    %v968 = vsub.f32 %v963, %v966
    %v969 = vsub.f32 %v964, %v967
    %v970 = vpack.c.bf16 %v969, %v968
    %971 = vmatprep.subr.bf16.mxu0 0
    %972 = vmatpush1.bf16.msra.mxu0 %v138
    %973 = vmatprep.subr.bf16.mxu0 0
    %974 = vmatpush1.bf16.msra.mxu0 %v139
    %975 = vmatprep.subr.bf16.mxu0 0
    %976 = vmatpush1.bf16.msra.mxu0 %v140
    %977 = vmatprep.subr.bf16.mxu0 0
    %978 = vmatpush1.bf16.msra.mxu0 %v141
    %979 = vmatprep.subr.bf16.mxu0 0
    %980 = vmatpush1.bf16.msra.mxu0 %v142
    %981 = vmatprep.subr.bf16.mxu0 0
    %982 = vmatpush1.bf16.msra.mxu0 %v143
    %983 = vmatprep.subr.bf16.mxu0 0
    %984 = vmatpush1.bf16.msra.mxu0 %v144
    %985 = vmatprep.subr.bf16.mxu0 0
    %986 = vmatpush1.bf16.msra.mxu0 %v145
    %987 = vmatprep.subr.bf16.mxu0 0
    %988 = vmatpush1.bf16.msra.mxu0 0
    %989 = vmatprep.subr.bf16.mxu0 0
    %990 = vmatpush1.bf16.msra.mxu0 0
    %991 = vmatprep.subr.bf16.mxu0 0
    %992 = vmatpush1.bf16.msra.mxu0 0
    %993 = vmatprep.subr.bf16.mxu0 0
    %994 = vmatpush1.bf16.msra.mxu0 0
    %995 = vmatprep.subr.bf16.mxu0 0
    %996 = vmatpush1.bf16.msra.mxu0 0
    %997 = vmatprep.subr.bf16.mxu0 0
    %998 = vmatpush1.bf16.msra.mxu0 0
    %999 = vmatprep.subr.bf16.mxu0 0
    %1000 = vmatpush1.bf16.msra.mxu0 0
    %1001 = vmatprep.subr.bf16.mxu0 0
    %1002 = vmatpush1.bf16.msra.mxu0 0
    %1003 = vmatprep.mubr.bf16.mxu0 0
    %1004 = vmatmul.mubr.bf16.gmra.mrb[0].mxu0 %v965
    %v1005 = vpop.f32.mrb[0].mxu0
    %v1006 = vadd.f32 0.0, %v1005
    %v1007 = vpop.f32.mrb[0].mxu0
    %v1008 = vpop.f32.mrb[0].mxu0
    %v1009 = vadd.f32 0.0, %v1008
    %v1010 = vpop.f32.mrb[0].mxu0
    %1011 = vdwg.mxu0
    %1012 = vmatprep.subr.bf16.mxu0 0
    %1013 = vmatpush1.bf16.msra.mxu0 %v98
    %1014 = vmatprep.subr.bf16.mxu0 0
    %1015 = vmatpush1.bf16.msra.mxu0 %v99
    %1016 = vmatprep.subr.bf16.mxu0 0
    %1017 = vmatpush1.bf16.msra.mxu0 %v100
    %1018 = vmatprep.subr.bf16.mxu0 0
    %1019 = vmatpush1.bf16.msra.mxu0 %v101
    %1020 = vmatprep.subr.bf16.mxu0 0
    %1021 = vmatpush1.bf16.msra.mxu0 %v102
    %1022 = vmatprep.subr.bf16.mxu0 0
    %1023 = vmatpush1.bf16.msra.mxu0 %v103
    %1024 = vmatprep.subr.bf16.mxu0 0
    %1025 = vmatpush1.bf16.msra.mxu0 %v104
    %1026 = vmatprep.subr.bf16.mxu0 0
    %1027 = vmatpush1.bf16.msra.mxu0 %v105
    %1028 = vmatprep.subr.bf16.mxu0 0
    %1029 = vmatpush1.bf16.msra.mxu0 0
    %1030 = vmatprep.subr.bf16.mxu0 0
    %1031 = vmatpush1.bf16.msra.mxu0 0
    %1032 = vmatprep.subr.bf16.mxu0 0
    %1033 = vmatpush1.bf16.msra.mxu0 0
    %1034 = vmatprep.subr.bf16.mxu0 0
    %1035 = vmatpush1.bf16.msra.mxu0 0
    %1036 = vmatprep.subr.bf16.mxu0 0
    %1037 = vmatpush1.bf16.msra.mxu0 0
    %1038 = vmatprep.subr.bf16.mxu0 0
    %1039 = vmatpush1.bf16.msra.mxu0 0
    %1040 = vmatprep.subr.bf16.mxu0 0
    %1041 = vmatpush1.bf16.msra.mxu0 0
    %1042 = vmatprep.subr.bf16.mxu0 0
    %1043 = vmatpush1.bf16.msra.mxu0 0
    %1044 = vmatprep.mubr.bf16.mxu0 0
    %1045 = vmatmul.mubr.bf16.gmra.mrb[0].mxu0 %v965
    %v1046 = vpop.f32.mrb[0].mxu0
    %v1047 = vadd.f32 %v1006, %v1046
    %v1048 = vpop.f32.mrb[0].mxu0
    %v1049 = vpop.f32.mrb[0].mxu0
    %v1050 = vadd.f32 %v1009, %v1049
    %v1051 = vpop.f32.mrb[0].mxu0
    %1052 = vdwg.mxu0
    %1053 = vmatprep.subr.bf16.mxu0 0
    %1054 = vmatpush1.bf16.msra.mxu0 %v98
    %1055 = vmatprep.subr.bf16.mxu0 0
    %1056 = vmatpush1.bf16.msra.mxu0 %v99
    %1057 = vmatprep.subr.bf16.mxu0 0
    %1058 = vmatpush1.bf16.msra.mxu0 %v100
    %1059 = vmatprep.subr.bf16.mxu0 0
    %1060 = vmatpush1.bf16.msra.mxu0 %v101
    %1061 = vmatprep.subr.bf16.mxu0 0
    %1062 = vmatpush1.bf16.msra.mxu0 %v102
    %1063 = vmatprep.subr.bf16.mxu0 0
    %1064 = vmatpush1.bf16.msra.mxu0 %v103
    %1065 = vmatprep.subr.bf16.mxu0 0
    %1066 = vmatpush1.bf16.msra.mxu0 %v104
    %1067 = vmatprep.subr.bf16.mxu0 0
    %1068 = vmatpush1.bf16.msra.mxu0 %v105
    %1069 = vmatprep.subr.bf16.mxu0 0
    %1070 = vmatpush1.bf16.msra.mxu0 0
    %1071 = vmatprep.subr.bf16.mxu0 0
    %1072 = vmatpush1.bf16.msra.mxu0 0
    %1073 = vmatprep.subr.bf16.mxu0 0
    %1074 = vmatpush1.bf16.msra.mxu0 0
    %1075 = vmatprep.subr.bf16.mxu0 0
    %1076 = vmatpush1.bf16.msra.mxu0 0
    %1077 = vmatprep.subr.bf16.mxu0 0
    %1078 = vmatpush1.bf16.msra.mxu0 0
    %1079 = vmatprep.subr.bf16.mxu0 0
    %1080 = vmatpush1.bf16.msra.mxu0 0
    %1081 = vmatprep.subr.bf16.mxu0 0
    %1082 = vmatpush1.bf16.msra.mxu0 0
    %1083 = vmatprep.subr.bf16.mxu0 0
    %1084 = vmatpush1.bf16.msra.mxu0 0
    %1085 = vmatprep.mubr.bf16.mxu0 0
    %1086 = vmatmul.mubr.bf16.gmra.mrb[0].mxu0 %v970
    %v1087 = vpop.f32.mrb[0].mxu0
    %v1088 = vadd.f32 0.0, %v1087
    %v1089 = vpop.f32.mrb[0].mxu0
    %v1090 = vpop.f32.mrb[0].mxu0
    %v1091 = vadd.f32 0.0, %v1090
    %v1092 = vpop.f32.mrb[0].mxu0
    %1093 = vdwg.mxu0
    %v1094 = vadd.f32 %v1047, %v1088
    %v1095 = vadd.f32 %v1050, %v1091
    %v1096 = vpack.c.bf16 %v1095, %v1094
    %v1097 = vunpack.c.l.bf16 %v1096
    %v1098 = vunpack.c.h.bf16 %v1096
    %v1099 = vsub.f32 %v1094, %v1097
    %v1100 = vsub.f32 %v1095, %v1098
    %v1101 = vpack.c.bf16 %v1100, %v1099
    %1102 = vmatprep.subr.bf16.mxu0 0
    %1103 = vmatpush1.bf16.msra.mxu0 %v1101
    %1104 = vmatprep.subr.bf16.mxu0 0
    %1105 = vmatpush1.bf16.msra.mxu0 0
    %1106 = vmatprep.subr.bf16.mxu0 0
    %1107 = vmatpush1.bf16.msra.mxu0 0
    %1108 = vmatprep.subr.bf16.mxu0 0
    %1109 = vmatpush1.bf16.msra.mxu0 0
    %1110 = vmatprep.subr.bf16.mxu0 0
    %1111 = vmatpush1.bf16.msra.mxu0 0
    %1112 = vmatprep.subr.bf16.mxu0 0
    %1113 = vmatpush1.bf16.msra.mxu0 0
    %1114 = vmatprep.subr.bf16.mxu0 0
    %1115 = vmatpush1.bf16.msra.mxu0 0
    %1116 = vmatprep.subr.bf16.mxu0 0
    %1117 = vmatpush1.bf16.msra.mxu0 0
    %1118 = vmatprep.subr.bf16.mxu0 0
    %1119 = vmatpush1.bf16.msra.mxu0 0
    %1120 = vmatprep.subr.bf16.mxu0 0
    %1121 = vmatpush1.bf16.msra.mxu0 0
    %1122 = vmatprep.subr.bf16.mxu0 0
    %1123 = vmatpush1.bf16.msra.mxu0 0
    %1124 = vmatprep.subr.bf16.mxu0 0
    %1125 = vmatpush1.bf16.msra.mxu0 0
    %1126 = vmatprep.subr.bf16.mxu0 0
    %1127 = vmatpush1.bf16.msra.mxu0 0
    %1128 = vmatprep.subr.bf16.mxu0 0
    %1129 = vmatpush1.bf16.msra.mxu0 0
    %1130 = vmatprep.subr.bf16.mxu0 0
    %1131 = vmatpush1.bf16.msra.mxu0 0
    %1132 = vmatprep.subr.bf16.mxu0 0
    %1133 = vmatpush1.bf16.msra.mxu0 0
    %1134 = vmatprep.mubr.bf16.mxu0 0
    %1135 = vmatmul.mubr.bf16.gmra.mrb[0].mxu0 %v289
    %v1136 = vpop.f32.mrb[0].mxu0
    %v1137 = vadd.f32 0.0, %v1136
    %v1138 = vpop.f32.mrb[0].mxu0
    %v1139 = vpop.f32.mrb[0].mxu0
    %v1140 = vadd.f32 0.0, %v1139
    %v1141 = vpop.f32.mrb[0].mxu0
    %1142 = vdwg.mxu0
    %1143 = vmatprep.subr.bf16.mxu0 0
    %1144 = vmatpush1.bf16.msra.mxu0 %v1096
    %1145 = vmatprep.subr.bf16.mxu0 0
    %1146 = vmatpush1.bf16.msra.mxu0 0
    %1147 = vmatprep.subr.bf16.mxu0 0
    %1148 = vmatpush1.bf16.msra.mxu0 0
    %1149 = vmatprep.subr.bf16.mxu0 0
    %1150 = vmatpush1.bf16.msra.mxu0 0
    %1151 = vmatprep.subr.bf16.mxu0 0
    %1152 = vmatpush1.bf16.msra.mxu0 0
    %1153 = vmatprep.subr.bf16.mxu0 0
    %1154 = vmatpush1.bf16.msra.mxu0 0
    %1155 = vmatprep.subr.bf16.mxu0 0
    %1156 = vmatpush1.bf16.msra.mxu0 0
    %1157 = vmatprep.subr.bf16.mxu0 0
    %1158 = vmatpush1.bf16.msra.mxu0 0
    %1159 = vmatprep.subr.bf16.mxu0 0
    %1160 = vmatpush1.bf16.msra.mxu0 0
    %1161 = vmatprep.subr.bf16.mxu0 0
    %1162 = vmatpush1.bf16.msra.mxu0 0
    %1163 = vmatprep.subr.bf16.mxu0 0
    %1164 = vmatpush1.bf16.msra.mxu0 0
    %1165 = vmatprep.subr.bf16.mxu0 0
    %1166 = vmatpush1.bf16.msra.mxu0 0
    %1167 = vmatprep.subr.bf16.mxu0 0
    %1168 = vmatpush1.bf16.msra.mxu0 0
    %1169 = vmatprep.subr.bf16.mxu0 0
    %1170 = vmatpush1.bf16.msra.mxu0 0
    %1171 = vmatprep.subr.bf16.mxu0 0
    %1172 = vmatpush1.bf16.msra.mxu0 0
    %1173 = vmatprep.subr.bf16.mxu0 0
    %1174 = vmatpush1.bf16.msra.mxu0 0
    %1175 = vmatprep.mubr.bf16.mxu0 0
    %1176 = vmatmul.mubr.bf16.gmra.mrb[0].mxu0 %v289
    %v1177 = vpop.f32.mrb[0].mxu0
    %v1178 = vadd.f32 %v1137, %v1177
    %v1179 = vpop.f32.mrb[0].mxu0
    %v1180 = vpop.f32.mrb[0].mxu0
    %v1181 = vadd.f32 %v1140, %v1180
    %v1182 = vpop.f32.mrb[0].mxu0
    %1183 = vdwg.mxu0
    %1184 = vmatprep.subr.bf16.mxu0 0
    %1185 = vmatpush1.bf16.msra.mxu0 %v1096
    %1186 = vmatprep.subr.bf16.mxu0 0
    %1187 = vmatpush1.bf16.msra.mxu0 0
    %1188 = vmatprep.subr.bf16.mxu0 0
    %1189 = vmatpush1.bf16.msra.mxu0 0
    %1190 = vmatprep.subr.bf16.mxu0 0
    %1191 = vmatpush1.bf16.msra.mxu0 0
    %1192 = vmatprep.subr.bf16.mxu0 0
    %1193 = vmatpush1.bf16.msra.mxu0 0
    %1194 = vmatprep.subr.bf16.mxu0 0
    %1195 = vmatpush1.bf16.msra.mxu0 0
    %1196 = vmatprep.subr.bf16.mxu0 0
    %1197 = vmatpush1.bf16.msra.mxu0 0
    %1198 = vmatprep.subr.bf16.mxu0 0
    %1199 = vmatpush1.bf16.msra.mxu0 0
    %1200 = vmatprep.subr.bf16.mxu0 0
    %1201 = vmatpush1.bf16.msra.mxu0 0
    %1202 = vmatprep.subr.bf16.mxu0 0
    %1203 = vmatpush1.bf16.msra.mxu0 0
    %1204 = vmatprep.subr.bf16.mxu0 0
    %1205 = vmatpush1.bf16.msra.mxu0 0
    %1206 = vmatprep.subr.bf16.mxu0 0
    %1207 = vmatpush1.bf16.msra.mxu0 0
    %1208 = vmatprep.subr.bf16.mxu0 0
    %1209 = vmatpush1.bf16.msra.mxu0 0
    %1210 = vmatprep.subr.bf16.mxu0 0
    %1211 = vmatpush1.bf16.msra.mxu0 0
    %1212 = vmatprep.subr.bf16.mxu0 0
    %1213 = vmatpush1.bf16.msra.mxu0 0
    %1214 = vmatprep.subr.bf16.mxu0 0
    %1215 = vmatpush1.bf16.msra.mxu0 0
    %1216 = vmatprep.mubr.bf16.mxu0 0
    %1217 = vmatmul.mubr.bf16.gmra.mrb[0].mxu0 %v374
    %v1218 = vpop.f32.mrb[0].mxu0
    %v1219 = vadd.f32 0.0, %v1218
    %v1220 = vpop.f32.mrb[0].mxu0
    %v1221 = vpop.f32.mrb[0].mxu0
    %v1222 = vadd.f32 0.0, %v1221
    %v1223 = vpop.f32.mrb[0].mxu0
    %1224 = vdwg.mxu0
    %v1225 = vadd.f32 %v1178, %v1219
    %v1226 = vadd.f32 %v1181, %v1222
    %v1227 = vsub.f32 %v1225, %v681
    %v1228 = vsub.f32 %v1226, %v682
    %v1229 = vmul.f32 %v148, %v148
    %v1230 = vmul.f32 %v149, %v149
    %v1231 = vpack.c.bf16 %v1230, %v1229
    %v1232 = vunpack.c.l.bf16 %v1231
    %v1233 = vunpack.c.h.bf16 %v1231
    %v1234 = vsub.f32 %v1229, %v1232
    %v1235 = vsub.f32 %v1230, %v1233
    %v1236 = vpack.c.bf16 %v1235, %v1234
    %1237 = vmatprep.subr.bf16.mxu0 0
    %1238 = vmatpush1.bf16.msra.mxu0 %v138
    %1239 = vmatprep.subr.bf16.mxu0 0
    %1240 = vmatpush1.bf16.msra.mxu0 %v139
    %1241 = vmatprep.subr.bf16.mxu0 0
    %1242 = vmatpush1.bf16.msra.mxu0 %v140
    %1243 = vmatprep.subr.bf16.mxu0 0
    %1244 = vmatpush1.bf16.msra.mxu0 %v141
    %1245 = vmatprep.subr.bf16.mxu0 0
    %1246 = vmatpush1.bf16.msra.mxu0 %v142
    %1247 = vmatprep.subr.bf16.mxu0 0
    %1248 = vmatpush1.bf16.msra.mxu0 %v143
    %1249 = vmatprep.subr.bf16.mxu0 0
    %1250 = vmatpush1.bf16.msra.mxu0 %v144
    %1251 = vmatprep.subr.bf16.mxu0 0
    %1252 = vmatpush1.bf16.msra.mxu0 %v145
    %1253 = vmatprep.subr.bf16.mxu0 0
    %1254 = vmatpush1.bf16.msra.mxu0 0
    %1255 = vmatprep.subr.bf16.mxu0 0
    %1256 = vmatpush1.bf16.msra.mxu0 0
    %1257 = vmatprep.subr.bf16.mxu0 0
    %1258 = vmatpush1.bf16.msra.mxu0 0
    %1259 = vmatprep.subr.bf16.mxu0 0
    %1260 = vmatpush1.bf16.msra.mxu0 0
    %1261 = vmatprep.subr.bf16.mxu0 0
    %1262 = vmatpush1.bf16.msra.mxu0 0
    %1263 = vmatprep.subr.bf16.mxu0 0
    %1264 = vmatpush1.bf16.msra.mxu0 0
    %1265 = vmatprep.subr.bf16.mxu0 0
    %1266 = vmatpush1.bf16.msra.mxu0 0
    %1267 = vmatprep.subr.bf16.mxu0 0
    %1268 = vmatpush1.bf16.msra.mxu0 0
    %1269 = vmatprep.mubr.bf16.mxu0 0
    %1270 = vmatmul.mubr.bf16.gmra.mrb[0].mxu0 %v1231
    %v1271 = vpop.f32.mrb[0].mxu0
    %v1272 = vadd.f32 0.0, %v1271
    %v1273 = vpop.f32.mrb[0].mxu0
    %v1274 = vpop.f32.mrb[0].mxu0
    %v1275 = vadd.f32 0.0, %v1274
    %v1276 = vpop.f32.mrb[0].mxu0
    %1277 = vdwg.mxu0
    %1278 = vmatprep.subr.bf16.mxu0 0
    %1279 = vmatpush1.bf16.msra.mxu0 %v98
    %1280 = vmatprep.subr.bf16.mxu0 0
    %1281 = vmatpush1.bf16.msra.mxu0 %v99
    %1282 = vmatprep.subr.bf16.mxu0 0
    %1283 = vmatpush1.bf16.msra.mxu0 %v100
    %1284 = vmatprep.subr.bf16.mxu0 0
    %1285 = vmatpush1.bf16.msra.mxu0 %v101
    %1286 = vmatprep.subr.bf16.mxu0 0
    %1287 = vmatpush1.bf16.msra.mxu0 %v102
    %1288 = vmatprep.subr.bf16.mxu0 0
    %1289 = vmatpush1.bf16.msra.mxu0 %v103
    %1290 = vmatprep.subr.bf16.mxu0 0
    %1291 = vmatpush1.bf16.msra.mxu0 %v104
    %1292 = vmatprep.subr.bf16.mxu0 0
    %1293 = vmatpush1.bf16.msra.mxu0 %v105
    %1294 = vmatprep.subr.bf16.mxu0 0
    %1295 = vmatpush1.bf16.msra.mxu0 0
    %1296 = vmatprep.subr.bf16.mxu0 0
    %1297 = vmatpush1.bf16.msra.mxu0 0
    %1298 = vmatprep.subr.bf16.mxu0 0
    %1299 = vmatpush1.bf16.msra.mxu0 0
    %1300 = vmatprep.subr.bf16.mxu0 0
    %1301 = vmatpush1.bf16.msra.mxu0 0
    %1302 = vmatprep.subr.bf16.mxu0 0
    %1303 = vmatpush1.bf16.msra.mxu0 0
    %1304 = vmatprep.subr.bf16.mxu0 0
    %1305 = vmatpush1.bf16.msra.mxu0 0
    %1306 = vmatprep.subr.bf16.mxu0 0
    %1307 = vmatpush1.bf16.msra.mxu0 0
    %1308 = vmatprep.subr.bf16.mxu0 0
    %1309 = vmatpush1.bf16.msra.mxu0 0
    %1310 = vmatprep.mubr.bf16.mxu0 0
    %1311 = vmatmul.mubr.bf16.gmra.mrb[0].mxu0 %v1231
    %v1312 = vpop.f32.mrb[0].mxu0
    %v1313 = vadd.f32 %v1272, %v1312
    %v1314 = vpop.f32.mrb[0].mxu0
    %v1315 = vpop.f32.mrb[0].mxu0
    %v1316 = vadd.f32 %v1275, %v1315
    %v1317 = vpop.f32.mrb[0].mxu0
    %1318 = vdwg.mxu0
    %1319 = vmatprep.subr.bf16.mxu0 0
    %1320 = vmatpush1.bf16.msra.mxu0 %v98
    %1321 = vmatprep.subr.bf16.mxu0 0
    %1322 = vmatpush1.bf16.msra.mxu0 %v99
    %1323 = vmatprep.subr.bf16.mxu0 0
    %1324 = vmatpush1.bf16.msra.mxu0 %v100
    %1325 = vmatprep.subr.bf16.mxu0 0
    %1326 = vmatpush1.bf16.msra.mxu0 %v101
    %1327 = vmatprep.subr.bf16.mxu0 0
    %1328 = vmatpush1.bf16.msra.mxu0 %v102
    %1329 = vmatprep.subr.bf16.mxu0 0
    %1330 = vmatpush1.bf16.msra.mxu0 %v103
    %1331 = vmatprep.subr.bf16.mxu0 0
    %1332 = vmatpush1.bf16.msra.mxu0 %v104
    %1333 = vmatprep.subr.bf16.mxu0 0
    %1334 = vmatpush1.bf16.msra.mxu0 %v105
    %1335 = vmatprep.subr.bf16.mxu0 0
    %1336 = vmatpush1.bf16.msra.mxu0 0
    %1337 = vmatprep.subr.bf16.mxu0 0
    %1338 = vmatpush1.bf16.msra.mxu0 0
    %1339 = vmatprep.subr.bf16.mxu0 0
    %1340 = vmatpush1.bf16.msra.mxu0 0
    %1341 = vmatprep.subr.bf16.mxu0 0
    %1342 = vmatpush1.bf16.msra.mxu0 0
    %1343 = vmatprep.subr.bf16.mxu0 0
    %1344 = vmatpush1.bf16.msra.mxu0 0
    %1345 = vmatprep.subr.bf16.mxu0 0
    %1346 = vmatpush1.bf16.msra.mxu0 0
    %1347 = vmatprep.subr.bf16.mxu0 0
    %1348 = vmatpush1.bf16.msra.mxu0 0
    %1349 = vmatprep.subr.bf16.mxu0 0
    %1350 = vmatpush1.bf16.msra.mxu0 0
    %1351 = vmatprep.mubr.bf16.mxu0 0
    %1352 = vmatmul.mubr.bf16.gmra.mrb[0].mxu0 %v1236
    %v1353 = vpop.f32.mrb[0].mxu0
    %v1354 = vadd.f32 0.0, %v1353
    %v1355 = vpop.f32.mrb[0].mxu0
    %v1356 = vpop.f32.mrb[0].mxu0
    %v1357 = vadd.f32 0.0, %v1356
    %v1358 = vpop.f32.mrb[0].mxu0
    %1359 = vdwg.mxu0
    %v1360 = vadd.f32 %v1313, %v1354
    %v1361 = vadd.f32 %v1316, %v1357
    %v1362 = vpack.c.bf16 %v1361, %v1360
    %v1363 = vunpack.c.l.bf16 %v1362
    %v1364 = vunpack.c.h.bf16 %v1362
    %v1365 = vsub.f32 %v1360, %v1363
    %v1366 = vsub.f32 %v1361, %v1364
    %v1367 = vpack.c.bf16 %v1366, %v1365
    %1368 = vmatprep.subr.bf16.mxu0 0
    %1369 = vmatpush1.bf16.msra.mxu0 %v1367
    %1370 = vmatprep.subr.bf16.mxu0 0
    %1371 = vmatpush1.bf16.msra.mxu0 0
    %1372 = vmatprep.subr.bf16.mxu0 0
    %1373 = vmatpush1.bf16.msra.mxu0 0
    %1374 = vmatprep.subr.bf16.mxu0 0
    %1375 = vmatpush1.bf16.msra.mxu0 0
    %1376 = vmatprep.subr.bf16.mxu0 0
    %1377 = vmatpush1.bf16.msra.mxu0 0
    %1378 = vmatprep.subr.bf16.mxu0 0
    %1379 = vmatpush1.bf16.msra.mxu0 0
    %1380 = vmatprep.subr.bf16.mxu0 0
    %1381 = vmatpush1.bf16.msra.mxu0 0
    %1382 = vmatprep.subr.bf16.mxu0 0
    %1383 = vmatpush1.bf16.msra.mxu0 0
    %1384 = vmatprep.subr.bf16.mxu0 0
    %1385 = vmatpush1.bf16.msra.mxu0 0
    %1386 = vmatprep.subr.bf16.mxu0 0
    %1387 = vmatpush1.bf16.msra.mxu0 0
    %1388 = vmatprep.subr.bf16.mxu0 0
    %1389 = vmatpush1.bf16.msra.mxu0 0
    %1390 = vmatprep.subr.bf16.mxu0 0
    %1391 = vmatpush1.bf16.msra.mxu0 0
    %1392 = vmatprep.subr.bf16.mxu0 0
    %1393 = vmatpush1.bf16.msra.mxu0 0
    %1394 = vmatprep.subr.bf16.mxu0 0
    %1395 = vmatpush1.bf16.msra.mxu0 0
    %1396 = vmatprep.subr.bf16.mxu0 0
    %1397 = vmatpush1.bf16.msra.mxu0 0
    %1398 = vmatprep.subr.bf16.mxu0 0
    %1399 = vmatpush1.bf16.msra.mxu0 0
    %1400 = vmatprep.mubr.bf16.mxu0 0
    %1401 = vmatmul.mubr.bf16.gmra.mrb[0].mxu0 %v289
    %v1402 = vpop.f32.mrb[0].mxu0
    %v1403 = vadd.f32 0.0, %v1402
    %v1404 = vpop.f32.mrb[0].mxu0
    %v1405 = vpop.f32.mrb[0].mxu0
    %v1406 = vadd.f32 0.0, %v1405
    %v1407 = vpop.f32.mrb[0].mxu0
    %1408 = vdwg.mxu0
    %1409 = vmatprep.subr.bf16.mxu0 0
    %1410 = vmatpush1.bf16.msra.mxu0 %v1362
    %1411 = vmatprep.subr.bf16.mxu0 0
    %1412 = vmatpush1.bf16.msra.mxu0 0
    %1413 = vmatprep.subr.bf16.mxu0 0
    %1414 = vmatpush1.bf16.msra.mxu0 0
    %1415 = vmatprep.subr.bf16.mxu0 0
    %1416 = vmatpush1.bf16.msra.mxu0 0
    %1417 = vmatprep.subr.bf16.mxu0 0
    %1418 = vmatpush1.bf16.msra.mxu0 0
    %1419 = vmatprep.subr.bf16.mxu0 0
    %1420 = vmatpush1.bf16.msra.mxu0 0
    %1421 = vmatprep.subr.bf16.mxu0 0
    %1422 = vmatpush1.bf16.msra.mxu0 0
    %1423 = vmatprep.subr.bf16.mxu0 0
    %1424 = vmatpush1.bf16.msra.mxu0 0
    %1425 = vmatprep.subr.bf16.mxu0 0
    %1426 = vmatpush1.bf16.msra.mxu0 0
    %1427 = vmatprep.subr.bf16.mxu0 0
    %1428 = vmatpush1.bf16.msra.mxu0 0
    %1429 = vmatprep.subr.bf16.mxu0 0
    %1430 = vmatpush1.bf16.msra.mxu0 0
    %1431 = vmatprep.subr.bf16.mxu0 0
    %1432 = vmatpush1.bf16.msra.mxu0 0
    %1433 = vmatprep.subr.bf16.mxu0 0
    %1434 = vmatpush1.bf16.msra.mxu0 0
    %1435 = vmatprep.subr.bf16.mxu0 0
    %1436 = vmatpush1.bf16.msra.mxu0 0
    %1437 = vmatprep.subr.bf16.mxu0 0
    %1438 = vmatpush1.bf16.msra.mxu0 0
    %1439 = vmatprep.subr.bf16.mxu0 0
    %1440 = vmatpush1.bf16.msra.mxu0 0
    %1441 = vmatprep.mubr.bf16.mxu0 0
    %1442 = vmatmul.mubr.bf16.gmra.mrb[0].mxu0 %v289
    %v1443 = vpop.f32.mrb[0].mxu0
    %v1444 = vadd.f32 %v1403, %v1443
    %v1445 = vpop.f32.mrb[0].mxu0
    %v1446 = vpop.f32.mrb[0].mxu0
    %v1447 = vadd.f32 %v1406, %v1446
    %v1448 = vpop.f32.mrb[0].mxu0
    %1449 = vdwg.mxu0
    %1450 = vmatprep.subr.bf16.mxu0 0
    %1451 = vmatpush1.bf16.msra.mxu0 %v1362
    %1452 = vmatprep.subr.bf16.mxu0 0
    %1453 = vmatpush1.bf16.msra.mxu0 0
    %1454 = vmatprep.subr.bf16.mxu0 0
    %1455 = vmatpush1.bf16.msra.mxu0 0
    %1456 = vmatprep.subr.bf16.mxu0 0
    %1457 = vmatpush1.bf16.msra.mxu0 0
    %1458 = vmatprep.subr.bf16.mxu0 0
    %1459 = vmatpush1.bf16.msra.mxu0 0
    %1460 = vmatprep.subr.bf16.mxu0 0
    %1461 = vmatpush1.bf16.msra.mxu0 0
    %1462 = vmatprep.subr.bf16.mxu0 0
    %1463 = vmatpush1.bf16.msra.mxu0 0
    %1464 = vmatprep.subr.bf16.mxu0 0
    %1465 = vmatpush1.bf16.msra.mxu0 0
    %1466 = vmatprep.subr.bf16.mxu0 0
    %1467 = vmatpush1.bf16.msra.mxu0 0
    %1468 = vmatprep.subr.bf16.mxu0 0
    %1469 = vmatpush1.bf16.msra.mxu0 0
    %1470 = vmatprep.subr.bf16.mxu0 0
    %1471 = vmatpush1.bf16.msra.mxu0 0
    %1472 = vmatprep.subr.bf16.mxu0 0
    %1473 = vmatpush1.bf16.msra.mxu0 0
    %1474 = vmatprep.subr.bf16.mxu0 0
    %1475 = vmatpush1.bf16.msra.mxu0 0
    %1476 = vmatprep.subr.bf16.mxu0 0
    %1477 = vmatpush1.bf16.msra.mxu0 0
    %1478 = vmatprep.subr.bf16.mxu0 0
    %1479 = vmatpush1.bf16.msra.mxu0 0
    %1480 = vmatprep.subr.bf16.mxu0 0
    %1481 = vmatpush1.bf16.msra.mxu0 0
    %1482 = vmatprep.mubr.bf16.mxu0 0
    %1483 = vmatmul.mubr.bf16.gmra.mrb[0].mxu0 %v374
    %v1484 = vpop.f32.mrb[0].mxu0
    %v1485 = vadd.f32 0.0, %v1484
    %v1486 = vpop.f32.mrb[0].mxu0
    %v1487 = vpop.f32.mrb[0].mxu0
    %v1488 = vadd.f32 0.0, %v1487
    %v1489 = vpop.f32.mrb[0].mxu0
    %1490 = vdwg.mxu0
    %v1491 = vadd.f32 %v1444, %v1485
    %v1492 = vadd.f32 %v1447, %v1488
    %v1493 = vsub.f32 %v1491, %v683
    %v1494 = vsub.f32 %v1492, %v684
    %v1495 = vadd.f32 %v1227, %v1493
    %v1496 = vadd.f32 %v1228, %v1494
    %v1497 = vadd.f32 %v681, %v683
    %v1498 = vadd.f32 %v682, %v684
    %v1499 = vadd.f32 %v1497, 0.0001
    %v1500 = vadd.f32 %v1498, 0.0001
    %v1501 = vadd.f32 %v1495, 0.0009
    %v1502 = vadd.f32 %v1496, 0.0009
    %v1503 = vmul.f32 %v1499, %v1501
    %v1504 = vmul.f32 %v1500, %v1502
    %v1505 = vrcp.pop %v1503
    %v1506 = vmul.f32 %v961, %v1505
    %v1507 = vrcp.pop %v1504
    %v1508 = vmul.f32 %v962, %v1507
    %v1509 = vadd.f32 %v1506, %v1508
    %v1510 = vrot.slane %v1509, 4
    %v1511 = vadd.f32 %v1509, %v1510
    %v1512 = vrot.slane %v1511, 2
    %v1513 = vadd.f32 %v1511, %v1512
    %v1514 = vrot.slane %v1513, 1
    %v1515 = vadd.f32 %v1513, %v1514
    %1516 = vst [vmem:[#allocation10] sm:$0x1] %v1515
    // Predicated region
    $region34: #{tpu_custom_call.1} parent=1 // pred_check
      _
    $region35: #{tpu_custom_call.1} parent=1 // pred_check_branch
      %1518 = sbr.rel (0) target = $region37
    $region36: #{tpu_custom_call.1} parent=1 // pred_region
      %s1520 = ssub.s32 16, 16
      %1521 = vsyncadd [#allocation4], %s1520
      %s1523 = sshll.u32 [#allocation10], 4
      %s1524 = int_to_ptr.vmem [resolvable:$true] %s1523
      %1526 = dma.vmem_to_hbm [thread:$0]  %s1524, 16, %s4, [#allocation4]
    $region37: #{tpu_custom_call.1} parent=1 // pred_fallthru
      _
    // Predicated region
    $region38: #{tpu_custom_call.1} parent=1 // pred_check
      _
    $region39: #{tpu_custom_call.1} parent=1 // pred_check_branch
      %1528 = sbr.rel (0) target = $region41
    $region40: #{tpu_custom_call.1} parent=1 // pred_region
      %1529 = dma.done [#allocation4], 16
    $region41: #{tpu_custom_call.1} parent=1 // pred_fallthru
      _
    %1530 = vsyncpa [#allocation3], 1
    %1531 = vsyncpa [#allocation6], 1
    %1532 = vsyncpa [#allocation9], 1
    %1533 = vsyncpa [#allocation4], 1

</llo_original>
